<compile_context>
chip_gen: v6e
topology: v6e:2x2x1
jax: 0.10.0
libtpu: 0.0.40
codegen_flags: <defaults>
</compile_context>

<pallas_src>
import functools

import jax
import jax.numpy as jnp
from jax.experimental import pallas as pl
from jax.experimental.pallas import tpu as pltpu


def graph_conv_kernel(adj_ref, edge_ref, node_ref, webig_ref, wij_ref, out_ref,
                      *, dilation):
    W = adj_ref.shape[-1]
    nout = out_ref.shape[1]
    R = nout * W
    f32 = jnp.float32

    # ---- adjacency preprocessing (GraphConv.forward prologue) ----
    adj0 = adj_ref[0]                                           # (W, W)
    row = jax.lax.broadcasted_iota(jnp.int32, (W, W), 0)
    col = jax.lax.broadcasted_iota(jnp.int32, (W, W), 1)
    eye = (row == col).astype(f32)
    padding_mask = (adj0 != 0.0).astype(f32)
    # Exact float equality matches the reference (adj values are 0/1/dilation
    # integers stored in float); result is exactly binary.
    adj = ((adj0 == float(dilation)).astype(f32) * (1.0 - eye) + eye) * padding_mask

    # ---- flattened-row helpers: row index r = o*W + i ----
    ri = jax.lax.broadcasted_iota(jnp.int32, (R, W), 0)
    ci = jax.lax.broadcasted_iota(jnp.int32, (R, W), 1)
    if (W & (W - 1)) == 0:
        i_of_r = jnp.bitwise_and(ri, W - 1)                     # r % W (W pow2)
    else:
        i_of_r = jax.lax.rem(ri, W)
    eye_t = (i_of_r == ci).astype(f32)                          # (R, W): delta(i, j)
    # adj tiled over output channels: adj_t[o*W+i, j] = adj[i, j]
    # (one-hot matmul on the otherwise idle MXU; exact for 0/1 values)
    adj_t = jnp.dot(eye_t, adj, preferred_element_type=f32)     # (R, W)

    # ---- EdgeConv 1x1 conv for ALL output channels: one MXU matmul ----
    # webig = kron(we, I_W): dist[o*W+i, j] = sum_c we[o,c] * edge[c,i,j]
    edge_flat = edge_ref[0].astype(f32)                         # (Ce*W, W)
    dist = jnp.dot(webig_ref[...], edge_flat,
                   preferred_element_type=f32)                  # (R, W)

    # masked softmax over the neighbor axis (lanes)
    s = jnp.where(adj_t == 0.0, -1e10, dist)
    s = s - jnp.max(s, axis=-1, keepdims=True)
    e = jnp.exp(s)
    inv = pl.reciprocal(jnp.sum(e, axis=-1, keepdims=True), approx=True)
    ew = e * inv * adj_t                                        # (R, W)

    # ---- NodeConv, factored:  conv{i,j}(node*adj)[o,i,j] = (w@node)[o,j]*adj[i,j]
    # wij = [kron(wi, 1_W); kron(wj, 1_W)] gives the (o,j) values already
    # broadcast over the query-row index i.
    node2d = node_ref[0].astype(f32)                            # (Cn, W)
    ninj = jnp.dot(wij_ref[...], node2d,
                   preferred_element_type=f32)                  # (2R, W)
    ni_b = ninj[:R]                                             # (R, W): (wi@node)[o, j]
    nj_b = ninj[R:]                                             # (R, W): (wj@node)[o, j]
    # diagonal uses convi, off-diagonal convj (the extra *adj of the reference
    # is absorbed into ew since adj is exactly binary)
    nf = nj_b + eye_t * (ni_b - nj_b)                           # (R, W)

    # ---- combine + reduce over neighbors ----
    rs = jnp.sum(nf * ew, axis=-1, keepdims=True)               # (R, 1): out[o, i]

    # unflatten r = o*W+i -> dense (nout, W) tile with a tiny one-hot matmul,
    # so the output store is a single full-tile store.
    d = eye_t * rs                                              # (R, W)
    oi = jax.lax.broadcasted_iota(jnp.int32, (nout, R), 0)
    rj = jax.lax.broadcasted_iota(jnp.int32, (nout, R), 1)
    sel = ((rj >= oi * W) & (rj < oi * W + W)).astype(f32)      # (nout, R): delta(o, r//W)
    out2d = jnp.dot(sel, d, preferred_element_type=f32)         # (nout, W)
    out_ref[0] = out2d.astype(out_ref.dtype)


def graph_conv(adj, edge, node, we, wi, wj, *, dilation=1):
    B, W, _ = adj.shape
    Ce = edge.shape[1]
    Cn = node.shape[1]
    nout = we.shape[0]

    # Layout-only wrapper work (weight repacking + contiguous reshape).
    edge_flat = edge.reshape(B, Ce * W, W)
    eyeW = jnp.eye(W, dtype=jnp.float32)
    onesW = jnp.ones((W, 1), dtype=jnp.float32)
    we_big = jnp.kron(we.astype(jnp.float32), eyeW)             # (nout*W, Ce*W)
    wij_rep = jnp.concatenate(
        [jnp.kron(wi.astype(jnp.float32), onesW),
         jnp.kron(wj.astype(jnp.float32), onesW)], axis=0)      # (2*nout*W, Cn)

    kernel = functools.partial(graph_conv_kernel, dilation=dilation)
    out = pl.pallas_call(
        kernel,
        out_shape=jax.ShapeDtypeStruct((B, nout, W), jnp.float32),
        grid_spec=pltpu.PrefetchScalarGridSpec(
            num_scalar_prefetch=0,
            grid=(B,),
            in_specs=[
                pl.BlockSpec((1, W, W), lambda b: (b, 0, 0)),
                pl.BlockSpec((1, Ce * W, W), lambda b: (b, 0, 0)),
                pl.BlockSpec((1, Cn, W), lambda b: (b, 0, 0)),
                pl.BlockSpec((nout * W, Ce * W), lambda b: (0, 0)),
                pl.BlockSpec((2 * nout * W, Cn), lambda b: (0, 0)),
            ],
            out_specs=pl.BlockSpec((1, nout, W), lambda b: (b, 0, 0)),
        ),
        compiler_params=pltpu.CompilerParams(
            dimension_semantics=("parallel",)),
    )(adj, edge_flat, node, we_big, wij_rep)
    return out                                                  # (B, nout, W)


def graph_conv_ref(adj, edge, node, we, wi, wj, *, dilation=1):
    """Pure-JAX reference mirroring the PyTorch module."""
    B, W, _ = adj.shape
    pm = (adj != 0).astype(jnp.float32)                         # (B, W, W)
    eye = jnp.eye(W, dtype=jnp.float32)
    a = (adj == dilation).astype(jnp.float32)
    a = a * (1.0 - eye) + eye
    a = a * pm                                                  # (B, W, W)
    # EdgeConv
    dist = jnp.einsum('oc,bcij->boij', we, edge)
    oute = dist * a[:, None]
    m0 = (a == 0).astype(jnp.float32)[:, None]
    oute = -1e10 * m0 + oute
    oute = jax.nn.softmax(oute, axis=-1)
    ew = oute * a[:, None]
    # NodeConv
    nb = node[:, :, None, :] * a[:, None]                       # (B, Cn, W, W)
    ni = jnp.einsum('oc,bcij->boij', wi, nb)
    njc = jnp.einsum('oc,bcij->boij', wj, nb)
    nf = eye * ni + (1.0 - eye) * njc
    return (nf * ew).sum(-1)                                    # (B, nout, W)


if __name__ == "__main__":
    B, W = 2, 16
    edge_nin, node_nin, nout = 4, 4, 8
    dilation = 1

    key = jax.random.PRNGKey(0)
    k1, k2, k3, k4, k5, k6 = jax.random.split(key, 6)
    adj = (jax.random.uniform(k1, (B, W, W)) > 0.5).astype(jnp.float32)
    edge = jax.random.normal(k2, (B, edge_nin, W, W), dtype=jnp.float32)
    node = jax.random.normal(k3, (B, node_nin, W), dtype=jnp.float32)
    # deterministic synthetic 1x1-conv weights (bias=False in the module)
    we = jax.random.normal(k4, (nout, edge_nin), dtype=jnp.float32) * 0.3
    wi = jax.random.normal(k5, (nout, node_nin), dtype=jnp.float32) * 0.3
    wj = jax.random.normal(k6, (nout, node_nin), dtype=jnp.float32) * 0.3

    out = graph_conv(adj, edge, node, we, wi, wj, dilation=dilation)
    out = jax.block_until_ready(out)

    ref = graph_conv_ref(adj, edge, node, we, wi, wj, dilation=dilation)
    assert out.shape == (B, nout, W), out.shape
    # tolerance accounts for the EUP approximate reciprocal in the softmax
    assert jnp.allclose(out, ref, atol=2e-3, rtol=2e-3), \
        float(jnp.max(jnp.abs(out - ref)))
    print("KERNEL_OK")
</pallas_src>

<mosaic_0001>
module attributes {stable_mosaic.version = 11 : i64} {
  func.func @graph_conv_kernel(%arg0: i32, %arg1: memref<1x16x16xf32, #tpu.memory_space<vmem>>, %arg2: memref<1x64x16xf32, #tpu.memory_space<vmem>>, %arg3: memref<1x4x16xf32, #tpu.memory_space<vmem>>, %arg4: memref<128x64xf32, #tpu.memory_space<vmem>>, %arg5: memref<256x4xf32, #tpu.memory_space<vmem>>, %arg6: memref<1x8x16xf32, #tpu.memory_space<vmem>>) attributes {dimension_semantics = [#tpu.dimension_semantics<parallel>], iteration_bounds = array<i64: 2>, scalar_prefetch = 0 : i64, scratch_operands = 0 : i64, tpu.core_type = #tpu.core_type<tc>, window_params = [{transform_indices = @transform_0, window_bounds = array<i64: 1, 16, 16>}, {transform_indices = @transform_1, window_bounds = array<i64: 1, 64, 16>}, {transform_indices = @transform_2, window_bounds = array<i64: 1, 4, 16>}, {pipeline_mode = #tpu.pipeline_mode<synchronous>, transform_indices = @transform_3, window_bounds = array<i64: 128, 64>}, {pipeline_mode = #tpu.pipeline_mode<synchronous>, transform_indices = @transform_4, window_bounds = array<i64: 256, 4>}, {transform_indices = @transform_5, window_bounds = array<i64: 1, 8, 16>}]} {
    %c0 = arith.constant 0 : index
    %c0_0 = arith.constant 0 : index
    %c0_1 = arith.constant 0 : index
    %0 = vector.load %arg1[%c0, %c0_0, %c0_1] : memref<1x16x16xf32, #tpu.memory_space<vmem>>, vector<1x16x16xf32>
    %1 = vector.shape_cast %0 : vector<1x16x16xf32> to vector<16x16xf32>
    %2 = tpu.iota {dimensions = array<i32: 0>} : vector<16x16xi32>
    %3 = tpu.iota {dimensions = array<i32: 1>} : vector<16x16xi32>
    %4 = arith.cmpi eq, %2, %3 : vector<16x16xi32>
    %5 = arith.extui %4 : vector<16x16xi1> to vector<16x16xi32>
    %6 = arith.sitofp %5 : vector<16x16xi32> to vector<16x16xf32>
    %cst = arith.constant 0.000000e+00 : f32
    %7 = vector.broadcast %cst : f32 to vector<16x16xf32>
    %8 = arith.cmpf one, %1, %7 : vector<16x16xf32>
    %9 = arith.extui %8 : vector<16x16xi1> to vector<16x16xi32>
    %10 = arith.sitofp %9 : vector<16x16xi32> to vector<16x16xf32>
    %cst_2 = arith.constant 1.000000e+00 : f32
    %11 = vector.broadcast %cst_2 : f32 to vector<16x16xf32>
    %12 = arith.cmpf oeq, %1, %11 : vector<16x16xf32>
    %13 = arith.extui %12 : vector<16x16xi1> to vector<16x16xi32>
    %14 = arith.sitofp %13 : vector<16x16xi32> to vector<16x16xf32>
    %cst_3 = arith.constant 1.000000e+00 : f32
    %15 = vector.broadcast %cst_3 : f32 to vector<16x16xf32>
    %16 = arith.subf %15, %6 : vector<16x16xf32>
    %17 = arith.mulf %14, %16 : vector<16x16xf32>
    %18 = arith.addf %17, %6 : vector<16x16xf32>
    %19 = arith.mulf %18, %10 : vector<16x16xf32>
    %20 = tpu.iota {dimensions = array<i32: 0>} : vector<128x16xi32>
    %21 = tpu.iota {dimensions = array<i32: 1>} : vector<128x16xi32>
    %c15_i32 = arith.constant 15 : i32
    %22 = vector.broadcast %c15_i32 : i32 to vector<128x16xi32>
    %23 = arith.andi %20, %22 : vector<128x16xi32>
    %24 = arith.cmpi eq, %23, %21 : vector<128x16xi32>
    %25 = arith.extui %24 : vector<128x16xi1> to vector<128x16xi32>
    %26 = arith.sitofp %25 : vector<128x16xi32> to vector<128x16xf32>
    %cst_4 = arith.constant dense<0.000000e+00> : vector<128x16xf32>
    %27 = tpu.matmul %26, %19, %cst_4 {dimension_numbers = #tpu.dot_dimension_numbers<[1], [0], [0], [1], [0, 0, 1, 1], [], []>} : vector<128x16xf32>, vector<16x16xf32>, vector<128x16xf32> -> vector<128x16xf32>
    %c0_5 = arith.constant 0 : index
    %c0_6 = arith.constant 0 : index
    %c0_7 = arith.constant 0 : index
    %28 = vector.load %arg2[%c0_5, %c0_6, %c0_7] : memref<1x64x16xf32, #tpu.memory_space<vmem>>, vector<1x64x16xf32>
    %29 = vector.shape_cast %28 : vector<1x64x16xf32> to vector<64x16xf32>
    %c0_8 = arith.constant 0 : index
    %c0_9 = arith.constant 0 : index
    %30 = vector.load %arg4[%c0_8, %c0_9] : memref<128x64xf32, #tpu.memory_space<vmem>>, vector<128x64xf32>
    %cst_10 = arith.constant dense<0.000000e+00> : vector<128x16xf32>
    %31 = tpu.matmul %30, %29, %cst_10 {dimension_numbers = #tpu.dot_dimension_numbers<[1], [0], [0], [1], [0, 0, 1, 1], [], []>} : vector<128x64xf32>, vector<64x16xf32>, vector<128x16xf32> -> vector<128x16xf32>
    %cst_11 = arith.constant 0.000000e+00 : f32
    %32 = vector.broadcast %cst_11 : f32 to vector<128x16xf32>
    %33 = arith.cmpf oeq, %27, %32 : vector<128x16xf32>
    %cst_12 = arith.constant -1.000000e+10 : f32
    %34 = vector.broadcast %cst_12 : f32 to vector<128x16xf32>
    %35 = arith.select %33, %34, %31 : vector<128x16xi1>, vector<128x16xf32>
    %cst_13 = arith.constant dense<0xFF800000> : vector<128xf32>
    %36 = vector.multi_reduction <maximumf>, %35, %cst_13 [1] : vector<128x16xf32> to vector<128xf32>
    %37 = vector.shape_cast %36 : vector<128xf32> to vector<128x1xf32>
    %38 = vector.broadcast %37 : vector<128x1xf32> to vector<128x16xf32>
    %39 = arith.subf %35, %38 : vector<128x16xf32>
    %40 = math.exp %39 : vector<128x16xf32>
    %cst_14 = arith.constant dense<0.000000e+00> : vector<128xf32>
    %41 = vector.multi_reduction <add>, %40, %cst_14 [1] : vector<128x16xf32> to vector<128xf32>
    %42 = vector.shape_cast %41 : vector<128xf32> to vector<128x1xf32>
    %43 = tpu.reciprocal %42 {approx = true} : vector<128x1xf32> -> vector<128x1xf32>
    %44 = vector.broadcast %43 : vector<128x1xf32> to vector<128x16xf32>
    %45 = arith.mulf %40, %44 : vector<128x16xf32>
    %46 = arith.mulf %45, %27 : vector<128x16xf32>
    %c0_15 = arith.constant 0 : index
    %c0_16 = arith.constant 0 : index
    %c0_17 = arith.constant 0 : index
    %47 = vector.load %arg3[%c0_15, %c0_16, %c0_17] : memref<1x4x16xf32, #tpu.memory_space<vmem>>, vector<1x4x16xf32>
    %48 = vector.shape_cast %47 : vector<1x4x16xf32> to vector<4x16xf32>
    %c0_18 = arith.constant 0 : index
    %c0_19 = arith.constant 0 : index
    %49 = vector.load %arg5[%c0_18, %c0_19] : memref<256x4xf32, #tpu.memory_space<vmem>>, vector<256x4xf32>
    %cst_20 = arith.constant dense<0.000000e+00> : vector<256x16xf32>
    %50 = tpu.matmul %49, %48, %cst_20 {dimension_numbers = #tpu.dot_dimension_numbers<[1], [0], [0], [1], [0, 0, 1, 1], [], []>} : vector<256x4xf32>, vector<4x16xf32>, vector<256x16xf32> -> vector<256x16xf32>
    %51 = vector.extract_strided_slice %50 {offsets = [0, 0], sizes = [128, 16], strides = [1, 1]} : vector<256x16xf32> to vector<128x16xf32>
    %52 = vector.extract_strided_slice %50 {offsets = [128, 0], sizes = [128, 16], strides = [1, 1]} : vector<256x16xf32> to vector<128x16xf32>
    %53 = arith.subf %51, %52 : vector<128x16xf32>
    %54 = arith.mulf %26, %53 : vector<128x16xf32>
    %55 = arith.addf %52, %54 : vector<128x16xf32>
    %56 = arith.mulf %55, %46 : vector<128x16xf32>
    %cst_21 = arith.constant dense<0.000000e+00> : vector<128xf32>
    %57 = vector.multi_reduction <add>, %56, %cst_21 [1] : vector<128x16xf32> to vector<128xf32>
    %58 = vector.shape_cast %57 : vector<128xf32> to vector<128x1xf32>
    %59 = vector.broadcast %58 : vector<128x1xf32> to vector<128x16xf32>
    %60 = arith.mulf %26, %59 : vector<128x16xf32>
    %61 = tpu.iota {dimensions = array<i32: 0>} : vector<8x128xi32>
    %62 = tpu.iota {dimensions = array<i32: 1>} : vector<8x128xi32>
    %c16_i32 = arith.constant 16 : i32
    %63 = vector.broadcast %c16_i32 : i32 to vector<8x128xi32>
    %64 = arith.muli %61, %63 : vector<8x128xi32>
    %65 = arith.cmpi sge, %62, %64 : vector<8x128xi32>
    %c16_i32_22 = arith.constant 16 : i32
    %66 = vector.broadcast %c16_i32_22 : i32 to vector<8x128xi32>
    %67 = arith.muli %61, %66 : vector<8x128xi32>
    %c16_i32_23 = arith.constant 16 : i32
    %68 = vector.broadcast %c16_i32_23 : i32 to vector<8x128xi32>
    %69 = arith.addi %67, %68 : vector<8x128xi32>
    %70 = arith.cmpi slt, %62, %69 : vector<8x128xi32>
    %71 = arith.andi %65, %70 : vector<8x128xi1>
    %72 = arith.extui %71 : vector<8x128xi1> to vector<8x128xi32>
    %73 = arith.sitofp %72 : vector<8x128xi32> to vector<8x128xf32>
    %cst_24 = arith.constant dense<0.000000e+00> : vector<8x16xf32>
    %74 = tpu.matmul %73, %60, %cst_24 {dimension_numbers = #tpu.dot_dimension_numbers<[1], [0], [0], [1], [0, 0, 1, 1], [], []>} : vector<8x128xf32>, vector<128x16xf32>, vector<8x16xf32> -> vector<8x16xf32>
    %c0_25 = arith.constant 0 : index
    %c0_26 = arith.constant 0 : index
    %c0_27 = arith.constant 0 : index
    %75 = vector.load %arg6[%c0_25, %c0_26, %c0_27] : memref<1x8x16xf32, #tpu.memory_space<vmem>>, vector<1x8x16xf32>
    %76 = vector.shape_cast %75 : vector<1x8x16xf32> to vector<8x16xf32>
    %77 = vector.shape_cast %74 : vector<8x16xf32> to vector<1x8x16xf32>
    tpu.vector_store %arg6[%c0_25, %c0_26, %c0_27], %77 {strides = array<i32>} : memref<1x8x16xf32, #tpu.memory_space<vmem>>, vector<1x8x16xf32>,
    return
  }
  func.func @transform_0(%arg0: i32) -> (i32, i32, i32) {
    %c0_i32 = arith.constant 0 : i32
    %c0_i32_0 = arith.constant 0 : i32
    %c0_i32_1 = arith.constant 0 : i32
    return %arg0, %c0_i32, %c0_i32_0 : i32, i32, i32
  }
  func.func @transform_1(%arg0: i32) -> (i32, i32, i32) {
    %c0_i32 = arith.constant 0 : i32
    %c0_i32_0 = arith.constant 0 : i32
    %c0_i32_1 = arith.constant 0 : i32
    return %arg0, %c0_i32, %c0_i32_0 : i32, i32, i32
  }
  func.func @transform_2(%arg0: i32) -> (i32, i32, i32) {
    %c0_i32 = arith.constant 0 : i32
    %c0_i32_0 = arith.constant 0 : i32
    %c0_i32_1 = arith.constant 0 : i32
    return %arg0, %c0_i32, %c0_i32_0 : i32, i32, i32
  }
  func.func @transform_3(%arg0: i32) -> (i32, i32) {
    %c0_i32 = arith.constant 0 : i32
    %c0_i32_0 = arith.constant 0 : i32
    %c0_i32_1 = arith.constant 0 : i32
    return %c0_i32, %c0_i32_0 : i32, i32
  }
  func.func @transform_4(%arg0: i32) -> (i32, i32) {
    %c0_i32 = arith.constant 0 : i32
    %c0_i32_0 = arith.constant 0 : i32
    %c0_i32_1 = arith.constant 0 : i32
    return %c0_i32, %c0_i32_0 : i32, i32
  }
  func.func @transform_5(%arg0: i32) -> (i32, i32, i32) {
    %c0_i32 = arith.constant 0 : i32
    %c0_i32_0 = arith.constant 0 : i32
    %c0_i32_1 = arith.constant 0 : i32
    return %arg0, %c0_i32, %c0_i32_0 : i32, i32, i32
  }
}

</mosaic_0001>

<llo_original>
// kernel: tpu_custom_call.1
$region0: #{tpu_custom_call.1}
  #allocation0 [shape = 'u32[]', space=smem, size = 0x4, offset = 0x4, fixed_abs, tag = 'smem constant byte address 0x4 - core index']
  #allocation1 [shape = 'u32[144,128]{1,0:T(1,128)}', space=vmem, size = 0x12000, scoped, tag = 'internal scratch']
  %s0 = inlined_call_operand.vmem [shape: f32[2,16,16], index: 0, kind: input, shape index: {}]
  %s1 = inlined_call_operand.vmem [shape: f32[2,64,16], index: 1, kind: input, shape index: {}]
  %s2 = inlined_call_operand.vmem [shape: f32[2,4,16], index: 2, kind: input, shape index: {}]
  %s3 = inlined_call_operand.vmem [shape: f32[128,64], index: 3, kind: input, shape index: {}]
  %s4 = inlined_call_operand.vmem [shape: f32[256,4], index: 4, kind: input, shape index: {}]
  %s5 = inlined_call_operand.hbm [shape: f32[2,8,16], index: 5, kind: output, shape index: {}]
  %s6 = sld [smem:[#allocation0]]
  $region53: #{tpu_custom_call.1} parent=0
    _
  %s8 = ssub.s32 1, %s6
  %s9 = scalar_select 0, %s8, %s6
  $region1: #{tpu_custom_call.1} parent=0
    #allocation2 [shape = 'u8[8192]{0}', space=vmem, size = 0x2000, scoped, tag = 'output window, operand 0']
    #allocation3 [shape = 's32[2]{0}', space=sflag, size = 0x8, scoped, tag = 'scoped memory for tpu_custom_call.1']
    %10 = vsyncpa [#allocation3], 0
    %s11 = scalar_lea.sflag [#allocation3], 1
    %12 = vsyncpa %s11, 0
    loop: start=0, step=1, limit=4
    $region2: #{tpu_custom_call.1} parent=1 // loop_pre_header
      _
    $region3: #{tpu_custom_call.1} parent=1 // loop_header
      %s14 = sphi 0, %s18
      %p15 = scmp.ge.s32.totalorder %s14, 4
      %s24 = sphi 0, %s26
      %s27 = sphi 0, %s24
      %s28 = sphi 0, %s27
      %s44 = sphi 0, %s28
      %s50 = sphi 0, %s52
      %s53 = sphi 0, %s50
      %s54 = sphi 0, %s53
      %s70 = sphi 0, %s54
      %s76 = sphi 0, %s78
      %s79 = sphi 0, %s76
      %s80 = sphi 0, %s79
      %s96 = sphi 0, %s80
      %s100 = sphi 0, %s100
      %s102 = sphi 0, %s100
      %s103 = sphi 0, %s102
      %s117 = sphi 0, %s103
      %s121 = sphi 0, %s121
      %s123 = sphi 0, %s121
      %s124 = sphi 0, %s123
      %s138 = sphi 0, %s124
      %s144 = sphi 0, %s146
      %s147 = sphi 0, %s144
      %s148 = sphi 0, %s147
      %s164 = sphi 0, %s148
    $region4: #{tpu_custom_call.1} parent=1 // loop_header_branch
      %17 = sbr.rel (%p15) target = $region8
    $region5: #{tpu_custom_call.1} parent=1 // loop_body
      %s19 = ssub.s32 %s14, 1
      %s20 = ssub.s32 %s14, 2
      %s21 = sadd.s32 %s14, 1
      %s22 = ssub.s32 %s14, %s21
      %p23 = scmp.eq.s32.totalorder %s22, 0
      %s25 = sadd.s32 %s24, 1
      %s26 = scalar_select %p23, %s24, %s25
      %p29 = pneg %p23
      %p30 = scmp.eq.s32.totalorder %s14, 1
      %p31 = por %p29, %p30
      %p32 = scmp.ne.s32.totalorder %s24, %s27
      %p33 = scmp.eq.s32.totalorder %s14, 0
      %p34 = por %p32, %p33
      %p35 = scmp.ne.s32.totalorder %s24, %s27
      %p36 = scmp.eq.s32.totalorder %s19, 1
      %p37 = por %p35, %p36
      %p38 = scmp.ne.s32.totalorder %s27, %s28
      %p39 = scmp.eq.s32.totalorder %s19, 0
      %p40 = por %p38, %p39
      %p41 = scmp.ne.s32.totalorder %s27, %s28
      %p42 = scmp.eq.s32.totalorder %s20, 1
      %p43 = por %p41, %p42
      %p45 = scmp.ne.s32.totalorder %s28, %s44
      %p46 = scmp.eq.s32.totalorder %s20, 0
      %p47 = por %p45, %p46
      %s48 = ssub.s32 %s14, %s21
      %p49 = scmp.eq.s32.totalorder %s48, 0
      %s51 = sadd.s32 %s50, 1
      %s52 = scalar_select %p49, %s50, %s51
      %p55 = pneg %p49
      %p56 = scmp.eq.s32.totalorder %s14, 1
      %p57 = por %p55, %p56
      %p58 = scmp.ne.s32.totalorder %s50, %s53
      %p59 = scmp.eq.s32.totalorder %s14, 0
      %p60 = por %p58, %p59
      %p61 = scmp.ne.s32.totalorder %s50, %s53
      %p62 = scmp.eq.s32.totalorder %s19, 1
      %p63 = por %p61, %p62
      %p64 = scmp.ne.s32.totalorder %s53, %s54
      %p65 = scmp.eq.s32.totalorder %s19, 0
      %p66 = por %p64, %p65
      %p67 = scmp.ne.s32.totalorder %s53, %s54
      %p68 = scmp.eq.s32.totalorder %s20, 1
      %p69 = por %p67, %p68
      %p71 = scmp.ne.s32.totalorder %s54, %s70
      %p72 = scmp.eq.s32.totalorder %s20, 0
      %p73 = por %p71, %p72
      %s74 = ssub.s32 %s14, %s21
      %p75 = scmp.eq.s32.totalorder %s74, 0
      %s77 = sadd.s32 %s76, 1
      %s78 = scalar_select %p75, %s76, %s77
      %p81 = pneg %p75
      %p82 = scmp.eq.s32.totalorder %s14, 1
      %p83 = por %p81, %p82
      %p84 = scmp.ne.s32.totalorder %s76, %s79
      %p85 = scmp.eq.s32.totalorder %s14, 0
      %p86 = por %p84, %p85
      %p87 = scmp.ne.s32.totalorder %s76, %s79
      %p88 = scmp.eq.s32.totalorder %s19, 1
      %p89 = por %p87, %p88
      %p90 = scmp.ne.s32.totalorder %s79, %s80
      %p91 = scmp.eq.s32.totalorder %s19, 0
      %p92 = por %p90, %p91
      %p93 = scmp.ne.s32.totalorder %s79, %s80
      %p94 = scmp.eq.s32.totalorder %s20, 1
      %p95 = por %p93, %p94
      %p97 = scmp.ne.s32.totalorder %s80, %s96
      %p98 = scmp.eq.s32.totalorder %s20, 0
      %p99 = por %p97, %p98
      %s101 = sadd.s32 %s100, 1
      %p104 = scmp.eq.s32.totalorder %s14, 1
      %p105 = scmp.ne.s32.totalorder %s100, %s102
      %p106 = scmp.eq.s32.totalorder %s14, 0
      %p107 = por %p105, %p106
      %p108 = scmp.ne.s32.totalorder %s100, %s102
      %p109 = scmp.eq.s32.totalorder %s19, 1
      %p110 = por %p108, %p109
      %p111 = scmp.ne.s32.totalorder %s102, %s103
      %p112 = scmp.eq.s32.totalorder %s19, 0
      %p113 = por %p111, %p112
      %p114 = scmp.ne.s32.totalorder %s102, %s103
      %p115 = scmp.eq.s32.totalorder %s20, 1
      %p116 = por %p114, %p115
      %p118 = scmp.ne.s32.totalorder %s103, %s117
      %p119 = scmp.eq.s32.totalorder %s20, 0
      %p120 = por %p118, %p119
      %s122 = sadd.s32 %s121, 1
      %p125 = scmp.eq.s32.totalorder %s14, 1
      %p126 = scmp.ne.s32.totalorder %s121, %s123
      %p127 = scmp.eq.s32.totalorder %s14, 0
      %p128 = por %p126, %p127
      %p129 = scmp.ne.s32.totalorder %s121, %s123
      %p130 = scmp.eq.s32.totalorder %s19, 1
      %p131 = por %p129, %p130
      %p132 = scmp.ne.s32.totalorder %s123, %s124
      %p133 = scmp.eq.s32.totalorder %s19, 0
      %p134 = por %p132, %p133
      %p135 = scmp.ne.s32.totalorder %s123, %s124
      %p136 = scmp.eq.s32.totalorder %s20, 1
      %p137 = por %p135, %p136
      %p139 = scmp.ne.s32.totalorder %s124, %s138
      %p140 = scmp.eq.s32.totalorder %s20, 0
      %p141 = por %p139, %p140
      %s142 = ssub.s32 %s14, %s21
      %p143 = scmp.eq.s32.totalorder %s142, 0
      %s145 = sadd.s32 %s144, 1
      %s146 = scalar_select %p143, %s144, %s145
      %p149 = pneg %p143
      %p150 = scmp.eq.s32.totalorder %s14, 1
      %p151 = por %p149, %p150
      %p152 = scmp.ne.s32.totalorder %s144, %s147
      %p153 = scmp.eq.s32.totalorder %s14, 0
      %p154 = por %p152, %p153
      %p155 = scmp.ne.s32.totalorder %s144, %s147
      %p156 = scmp.eq.s32.totalorder %s19, 1
      %p157 = por %p155, %p156
      %p158 = scmp.ne.s32.totalorder %s147, %s148
      %p159 = scmp.eq.s32.totalorder %s19, 0
      %p160 = por %p158, %p159
      %p161 = scmp.ne.s32.totalorder %s147, %s148
      %p162 = scmp.eq.s32.totalorder %s20, 1
      %p163 = por %p161, %p162
      %p165 = scmp.ne.s32.totalorder %s148, %s164
      %p166 = scmp.eq.s32.totalorder %s20, 0
      %p167 = por %p165, %p166
      %p168 = scmp.le.s32.totalorder 1, %s14
      %p169 = scmp.lt.s32.totalorder %s14, 3
      %p170 = pnand %p168, %p169
      %p171 = pneg %p170
      // Predicated region
      $region9: #{tpu_custom_call.1} parent=5 // pred_check
        _
      $region10: #{tpu_custom_call.1} parent=5 // pred_check_branch
        %173 = sbr.rel (%p170) target = $region12
      $region11: #{tpu_custom_call.1} parent=5 // pred_region
        %s174 = ssub.s32 %s14, 1
        // Predicated region
        $region13: #{tpu_custom_call.1} parent=11 // pred_check
          %p175 = pneg %p113
        $region14: #{tpu_custom_call.1} parent=11 // pred_check_branch
          %177 = sbr.rel (%p175) target = $region16
        $region15: #{tpu_custom_call.1} parent=11 // pred_region
          _
        $region16: #{tpu_custom_call.1} parent=11 // pred_fallthru
          _
        // Predicated region
        $region17: #{tpu_custom_call.1} parent=11 // pred_check
          %p178 = pneg %p134
        $region18: #{tpu_custom_call.1} parent=11 // pred_check_branch
          %180 = sbr.rel (%p178) target = $region20
        $region19: #{tpu_custom_call.1} parent=11 // pred_region
          _
        $region20: #{tpu_custom_call.1} parent=11 // pred_fallthru
          _
      $region12: #{tpu_custom_call.1} parent=5 // pred_fallthru
        _
      %p181 = scmp.lt.s32.totalorder %s14, 2
      // Predicated region
      $region21: #{tpu_custom_call.1} parent=5 // pred_check
        %p182 = pneg %p181
      $region22: #{tpu_custom_call.1} parent=5 // pred_check_branch
        %184 = sbr.rel (%p182) target = $region24
      $region23: #{tpu_custom_call.1} parent=5 // pred_region
        // Predicated region
        $region25: #{tpu_custom_call.1} parent=23 // pred_check
          %p185 = pneg %p34
        $region26: #{tpu_custom_call.1} parent=23 // pred_check_branch
          %187 = sbr.rel (%p185) target = $region28
        $region27: #{tpu_custom_call.1} parent=23 // pred_region
          %p188 = scmp.lt.s32.totalorder %s14, 1
          %s189 = scalar_select %p188, %s14, 1
          %s190 = smul.addr %s189, 2
          %s191 = smul.addr %s190, 8
          %s192 = scalar_lea.vmem %s0, %s191
        $region28: #{tpu_custom_call.1} parent=23 // pred_fallthru
          _
        // Predicated region
        $region29: #{tpu_custom_call.1} parent=23 // pred_check
          %p193 = pneg %p60
        $region30: #{tpu_custom_call.1} parent=23 // pred_check_branch
          %195 = sbr.rel (%p193) target = $region32
        $region31: #{tpu_custom_call.1} parent=23 // pred_region
          %p196 = scmp.lt.s32.totalorder %s14, 1
          %s197 = scalar_select %p196, %s14, 1
          %s198 = smul.addr %s197, 8
          %s199 = smul.addr %s198, 8
          %s200 = scalar_lea.vmem %s1, %s199
        $region32: #{tpu_custom_call.1} parent=23 // pred_fallthru
          _
        // Predicated region
        $region33: #{tpu_custom_call.1} parent=23 // pred_check
          %p201 = pneg %p86
        $region34: #{tpu_custom_call.1} parent=23 // pred_check_branch
          %203 = sbr.rel (%p201) target = $region36
        $region35: #{tpu_custom_call.1} parent=23 // pred_region
          %p204 = scmp.lt.s32.totalorder %s14, 1
          %s205 = scalar_select %p204, %s14, 1
          %s206 = smul.addr %s205, 4
          %s207 = scalar_lea.vmem %s2, %s206
        $region36: #{tpu_custom_call.1} parent=23 // pred_fallthru
          _
      $region24: #{tpu_custom_call.1} parent=5 // pred_fallthru
        _
      %p208 = scmp.le.s32.totalorder 1, %s14
      %p209 = scmp.lt.s32.totalorder %s14, 3
      %p210 = pnand %p208, %p209
      %p211 = pneg %p210
      // Predicated region
      $region37: #{tpu_custom_call.1} parent=5 // pred_check
        _
      $region38: #{tpu_custom_call.1} parent=5 // pred_check_branch
        %213 = sbr.rel (%p210) target = $region40
      $region39: #{tpu_custom_call.1} parent=5 // pred_region
        %s214 = ssub.s32 %s14, 1
        %p215 = scmp.lt.s32.totalorder %s19, 1
        %s216 = scalar_select %p215, %s19, 1
        %s217 = smul.addr %s216, 2
        %s218 = smul.addr %s217, 8
        %s219 = scalar_lea.vmem %s0, %s218
        %p220 = pneg %p40
        %p221 = pneg %p37
        %p222 = scmp.lt.s32.totalorder %s19, 1
        %s223 = scalar_select %p222, %s19, 1
        %s224 = smul.addr %s223, 8
        %s225 = smul.addr %s224, 8
        %s226 = scalar_lea.vmem %s1, %s225
        %p227 = pneg %p66
        %p228 = pneg %p63
        %p229 = scmp.lt.s32.totalorder %s19, 1
        %s230 = scalar_select %p229, %s19, 1
        %s231 = smul.addr %s230, 4
        %s232 = scalar_lea.vmem %s2, %s231
        %p233 = pneg %p92
        %p234 = pneg %p89
        %p235 = pneg %p113
        %p236 = pneg %p110
        %p237 = pneg %p134
        %p238 = pneg %p131
        %p239 = pneg %p160
        %p240 = pneg %p157
        %s241 = sand.u32 %s147, 1
        %s242 = scalar_lea.sflag [#allocation3], %s241
        %s243 = sand.u32 %s147, 1
        %s244 = smul.addr %s243, 8
        %s245 = scalar_lea.vmem [#allocation2], %s244
        %p246 = scmp.lt.s32.totalorder %s19, 1
        %s247 = scalar_select %p246, %s19, 1
        %s248 = smul.addr %s247, 2
        %s249 = smul.addr %s248, 8
        %s250 = scalar_lea.vmem %s0, %s249
        %p251 = scmp.lt.s32.totalorder %s19, 1
        %s252 = scalar_select %p251, %s19, 1
        %s253 = smul.addr %s252, 8
        %s254 = smul.addr %s253, 8
        %s255 = scalar_lea.vmem %s1, %s254
        %p256 = scmp.lt.s32.totalorder %s19, 1
        %s257 = scalar_select %p256, %s19, 1
        %s258 = smul.addr %s257, 4
        %s259 = scalar_lea.vmem %s2, %s258
        %v260 = vld [vmem:[%s250] sm:$0xff]
        %v261 = vld [vmem:[%s250 + $0x8] sm:$0xff]
        %v262 = vlaneseq
        %v263 = vshrl.u32 %v262, 7
        %v264 = vadd.s32 %v263, 8
        %v265 = vlaneseq
        %v266 = vand.u32 %v265, 127
        %vm267 = vcmp.eq.s32.totalorder %v263, %v266
        %vm268 = vcmp.eq.s32.totalorder %v264, %v266
        %v269 = vsel %vm267, 1, 0
        %v270 = vsel %vm268, 1, 0
        %v271 = vcvt.s32.f32 %v269
        %v272 = vcvt.s32.f32 %v270
        %vm273 = vcmp.ne.f32.partialorder %v260, 0.0
        %vm274 = vcmp.ne.f32.partialorder %v261, 0.0
        %v275 = vsel %vm273, 1, 0
        %v276 = vsel %vm274, 1, 0
        %v277 = vcvt.s32.f32 %v275
        %v278 = vcvt.s32.f32 %v276
        %vm279 = vcmp.eq.f32.partialorder %v260, 1.0
        %vm280 = vcmp.eq.f32.partialorder %v261, 1.0
        %v281 = vsel %vm279, 1, 0
        %v282 = vsel %vm280, 1, 0
        %v283 = vcvt.s32.f32 %v281
        %v284 = vcvt.s32.f32 %v282
        %v285 = vsub.f32 1.0, %v271
        %v286 = vsub.f32 1.0, %v272
        %v287 = vmul.f32 %v283, %v285
        %v288 = vmul.f32 %v284, %v286
        %v289 = vadd.f32 %v287, %v271
        %v290 = vadd.f32 %v288, %v272
        %v291 = vmul.f32 %v289, %v277
        %v292 = vmul.f32 %v290, %v278
        %v293 = vadd.s32 %v263, 16
        %v294 = vadd.s32 %v263, 24
        %v295 = vadd.s32 %v263, 32
        %v296 = vadd.s32 %v263, 40
        %v297 = vadd.s32 %v263, 48
        %v298 = vadd.s32 %v263, 56
        %v299 = vadd.s32 %v263, 64
        %v300 = vadd.s32 %v263, 72
        %v301 = vadd.s32 %v263, 80
        %v302 = vadd.s32 %v263, 88
        %v303 = vadd.s32 %v263, 96
        %v304 = vadd.s32 %v263, 104
        %v305 = vadd.s32 %v263, 112
        %v306 = vadd.s32 %v263, 120
        %v307 = vand.u32 %v263, 15
        %v308 = vand.u32 %v264, 15
        %v309 = vand.u32 %v293, 15
        %v310 = vand.u32 %v294, 15
        %v311 = vand.u32 %v295, 15
        %v312 = vand.u32 %v296, 15
        %v313 = vand.u32 %v297, 15
        %v314 = vand.u32 %v298, 15
        %v315 = vand.u32 %v299, 15
        %v316 = vand.u32 %v300, 15
        %v317 = vand.u32 %v301, 15
        %v318 = vand.u32 %v302, 15
        %v319 = vand.u32 %v303, 15
        %v320 = vand.u32 %v304, 15
        %v321 = vand.u32 %v305, 15
        %v322 = vand.u32 %v306, 15
        %vm323 = vcmp.eq.s32.totalorder %v307, %v266
        %vm324 = vcmp.eq.s32.totalorder %v308, %v266
        %vm325 = vcmp.eq.s32.totalorder %v309, %v266
        %vm326 = vcmp.eq.s32.totalorder %v310, %v266
        %vm327 = vcmp.eq.s32.totalorder %v311, %v266
        %vm328 = vcmp.eq.s32.totalorder %v312, %v266
        %vm329 = vcmp.eq.s32.totalorder %v313, %v266
        %vm330 = vcmp.eq.s32.totalorder %v314, %v266
        %vm331 = vcmp.eq.s32.totalorder %v315, %v266
        %vm332 = vcmp.eq.s32.totalorder %v316, %v266
        %vm333 = vcmp.eq.s32.totalorder %v317, %v266
        %vm334 = vcmp.eq.s32.totalorder %v318, %v266
        %vm335 = vcmp.eq.s32.totalorder %v319, %v266
        %vm336 = vcmp.eq.s32.totalorder %v320, %v266
        %vm337 = vcmp.eq.s32.totalorder %v321, %v266
        %vm338 = vcmp.eq.s32.totalorder %v322, %v266
        %v339 = vsel %vm323, 1, 0
        %v340 = vsel %vm324, 1, 0
        %v341 = vsel %vm325, 1, 0
        %v342 = vsel %vm326, 1, 0
        %v343 = vsel %vm327, 1, 0
        %v344 = vsel %vm328, 1, 0
        %v345 = vsel %vm329, 1, 0
        %v346 = vsel %vm330, 1, 0
        %v347 = vsel %vm331, 1, 0
        %v348 = vsel %vm332, 1, 0
        %v349 = vsel %vm333, 1, 0
        %v350 = vsel %vm334, 1, 0
        %v351 = vsel %vm335, 1, 0
        %v352 = vsel %vm336, 1, 0
        %v353 = vsel %vm337, 1, 0
        %v354 = vsel %vm338, 1, 0
        %v355 = vcvt.s32.f32 %v339
        %v356 = vcvt.s32.f32 %v340
        %v357 = vcvt.s32.f32 %v341
        %v358 = vcvt.s32.f32 %v342
        %v359 = vcvt.s32.f32 %v343
        %v360 = vcvt.s32.f32 %v344
        %v361 = vcvt.s32.f32 %v345
        %v362 = vcvt.s32.f32 %v346
        %v363 = vcvt.s32.f32 %v347
        %v364 = vcvt.s32.f32 %v348
        %v365 = vcvt.s32.f32 %v349
        %v366 = vcvt.s32.f32 %v350
        %v367 = vcvt.s32.f32 %v351
        %v368 = vcvt.s32.f32 %v352
        %v369 = vcvt.s32.f32 %v353
        %v370 = vcvt.s32.f32 %v354
        %vm371 = vcmask 130048
        %v373 = vsel %vm371, %v355, 0
        %v376 = vsel %vm371, %v356, 0
        %v379 = vsel %vm371, %v357, 0
        %v382 = vsel %vm371, %v358, 0
        %v385 = vsel %vm371, %v359, 0
        %v388 = vsel %vm371, %v360, 0
        %v391 = vsel %vm371, %v361, 0
        %v394 = vsel %vm371, %v362, 0
        %v397 = vsel %vm371, %v363, 0
        %v400 = vsel %vm371, %v364, 0
        %v403 = vsel %vm371, %v365, 0
        %v406 = vsel %vm371, %v366, 0
        %v409 = vsel %vm371, %v367, 0
        %v412 = vsel %vm371, %v368, 0
        %v415 = vsel %vm371, %v369, 0
        %v418 = vsel %vm371, %v370, 0
        %420 = vmatprep.subr.mxu0 0.0
        %421 = vmatpush1.msra.mxu0 0.0
        %422 = vmatprep.subr.mxu0 0.0
        %423 = vmatpush1.msra.mxu0 0.0
        %424 = vmatprep.subr.mxu0 0.0
        %425 = vmatpush1.msra.mxu0 0.0
        %426 = vmatprep.subr.mxu0 0.0
        %427 = vmatpush1.msra.mxu0 0.0
        %428 = vmatprep.subr.mxu0 0.0
        %429 = vmatpush1.msra.mxu0 0.0
        %430 = vmatprep.subr.mxu0 0.0
        %431 = vmatpush1.msra.mxu0 0.0
        %432 = vmatprep.subr.mxu0 0.0
        %433 = vmatpush1.msra.mxu0 0.0
        %434 = vmatprep.subr.mxu0 0.0
        %435 = vmatpush1.msra.mxu0 0.0
        %436 = vmatprep.subr.mxu0 0.0
        %437 = vmatpush1.msra.mxu0 0.0
        %438 = vmatprep.subr.mxu0 0.0
        %439 = vmatpush1.msra.mxu0 0.0
        %440 = vmatprep.subr.mxu0 0.0
        %441 = vmatpush1.msra.mxu0 0.0
        %442 = vmatprep.subr.mxu0 0.0
        %443 = vmatpush1.msra.mxu0 0.0
        %444 = vmatprep.subr.mxu0 0.0
        %445 = vmatpush1.msra.mxu0 0.0
        %446 = vmatprep.subr.mxu0 0.0
        %447 = vmatpush1.msra.mxu0 0.0
        %448 = vmatprep.subr.mxu0 0.0
        %449 = vmatpush1.msra.mxu0 %v292
        %450 = vmatprep.subr.mxu0 0.0
        %451 = vmatpush1.msra.mxu0 %v291
        %452 = vmatprep.subr.mxu0 0.0
        %453 = vmatpush2.msra.mxu0 0.0
        %454 = vmatprep.subr.mxu0 0.0
        %455 = vmatpush2.msra.mxu0 0.0
        %456 = vmatprep.subr.mxu0 0.0
        %457 = vmatpush2.msra.mxu0 0.0
        %458 = vmatprep.subr.mxu0 0.0
        %459 = vmatpush2.msra.mxu0 0.0
        %460 = vmatprep.subr.mxu0 0.0
        %461 = vmatpush2.msra.mxu0 0.0
        %462 = vmatprep.subr.mxu0 0.0
        %463 = vmatpush2.msra.mxu0 0.0
        %464 = vmatprep.subr.mxu0 0.0
        %465 = vmatpush2.msra.mxu0 0.0
        %466 = vmatprep.subr.mxu0 0.0
        %467 = vmatpush2.msra.mxu0 0.0
        %468 = vmatprep.subr.mxu0 0.0
        %469 = vmatpush2.msra.mxu0 0.0
        %470 = vmatprep.subr.mxu0 0.0
        %471 = vmatpush2.msra.mxu0 0.0
        %472 = vmatprep.subr.mxu0 0.0
        %473 = vmatpush2.msra.mxu0 0.0
        %474 = vmatprep.subr.mxu0 0.0
        %475 = vmatpush2.msra.mxu0 0.0
        %476 = vmatprep.subr.mxu0 0.0
        %477 = vmatpush2.msra.mxu0 0.0
        %478 = vmatprep.subr.mxu0 0.0
        %479 = vmatpush2.msra.mxu0 0.0
        %480 = vmatprep.subr.mxu0 0.0
        %481 = vmatpush2.msra.mxu0 0.0
        %482 = vmatprep.subr.mxu0 0.0
        %483 = vmatpush2.msra.mxu0 0.0
        %484 = vmatprep.mubr.f32.mxu0 0.0
        %485 = vmatmul.mubr.f32.gmra.mxu0 %v373
        %v486 = vpop.f32.mrf.mxu0
        %v487 = vadd.f32 0.0, %v486
        %v488 = vpop.f32.mrf.mxu0
        %489 = vmatprep.mubr.f32.mxu0 0.0
        %490 = vmatmul.mubr.f32.gmra.mxu0 %v376
        %v491 = vpop.f32.mrf.mxu0
        %v492 = vadd.f32 0.0, %v491
        %v493 = vpop.f32.mrf.mxu0
        %494 = vmatprep.mubr.f32.mxu0 0.0
        %495 = vmatmul.mubr.f32.gmra.mxu0 %v379
        %v496 = vpop.f32.mrf.mxu0
        %v497 = vadd.f32 0.0, %v496
        %v498 = vpop.f32.mrf.mxu0
        %499 = vmatprep.mubr.f32.mxu0 0.0
        %500 = vmatmul.mubr.f32.gmra.mxu0 %v382
        %v501 = vpop.f32.mrf.mxu0
        %v502 = vadd.f32 0.0, %v501
        %v503 = vpop.f32.mrf.mxu0
        %504 = vmatprep.mubr.f32.mxu0 0.0
        %505 = vmatmul.mubr.f32.gmra.mxu0 %v385
        %v506 = vpop.f32.mrf.mxu0
        %v507 = vadd.f32 0.0, %v506
        %v508 = vpop.f32.mrf.mxu0
        %509 = vmatprep.mubr.f32.mxu0 0.0
        %510 = vmatmul.mubr.f32.gmra.mxu0 %v388
        %v511 = vpop.f32.mrf.mxu0
        %v512 = vadd.f32 0.0, %v511
        %v513 = vpop.f32.mrf.mxu0
        %514 = vmatprep.mubr.f32.mxu0 0.0
        %515 = vmatmul.mubr.f32.gmra.mxu0 %v391
        %v516 = vpop.f32.mrf.mxu0
        %v517 = vadd.f32 0.0, %v516
        %v518 = vpop.f32.mrf.mxu0
        %519 = vmatprep.mubr.f32.mxu0 0.0
        %520 = vmatmul.mubr.f32.gmra.mxu0 %v394
        %v521 = vpop.f32.mrf.mxu0
        %v522 = vadd.f32 0.0, %v521
        %v523 = vpop.f32.mrf.mxu0
        %524 = vmatprep.mubr.f32.mxu0 0.0
        %525 = vmatmul.mubr.f32.gmra.mxu0 %v397
        %v526 = vpop.f32.mrf.mxu0
        %v527 = vadd.f32 0.0, %v526
        %v528 = vpop.f32.mrf.mxu0
        %529 = vmatprep.mubr.f32.mxu0 0.0
        %530 = vmatmul.mubr.f32.gmra.mxu0 %v400
        %v531 = vpop.f32.mrf.mxu0
        %v532 = vadd.f32 0.0, %v531
        %v533 = vpop.f32.mrf.mxu0
        %534 = vmatprep.mubr.f32.mxu0 0.0
        %535 = vmatmul.mubr.f32.gmra.mxu0 %v403
        %v536 = vpop.f32.mrf.mxu0
        %v537 = vadd.f32 0.0, %v536
        %v538 = vpop.f32.mrf.mxu0
        %539 = vmatprep.mubr.f32.mxu0 0.0
        %540 = vmatmul.mubr.f32.gmra.mxu0 %v406
        %v541 = vpop.f32.mrf.mxu0
        %v542 = vadd.f32 0.0, %v541
        %v543 = vpop.f32.mrf.mxu0
        %544 = vmatprep.mubr.f32.mxu0 0.0
        %545 = vmatmul.mubr.f32.gmra.mxu0 %v409
        %v546 = vpop.f32.mrf.mxu0
        %v547 = vadd.f32 0.0, %v546
        %v548 = vpop.f32.mrf.mxu0
        %549 = vmatprep.mubr.f32.mxu0 0.0
        %550 = vmatmul.mubr.f32.gmra.mxu0 %v412
        %v551 = vpop.f32.mrf.mxu0
        %v552 = vadd.f32 0.0, %v551
        %v553 = vpop.f32.mrf.mxu0
        %554 = vmatprep.mubr.f32.mxu0 0.0
        %555 = vmatmul.mubr.f32.gmra.mxu0 %v415
        %v556 = vpop.f32.mrf.mxu0
        %v557 = vadd.f32 0.0, %v556
        %v558 = vpop.f32.mrf.mxu0
        %559 = vmatprep.mubr.f32.mxu0 0.0
        %560 = vmatmul.mubr.f32.gmra.mxu0 %v418
        %v561 = vpop.f32.mrf.mxu0
        %v562 = vadd.f32 0.0, %v561
        %v563 = vpop.f32.mrf.mxu0
        %564 = vdwg.mxu0
        %v565 = vld [vmem:[%s255] sm:$0xff]
        %v566 = vld [vmem:[%s255 + $0x8] sm:$0xff]
        %v567 = vld [vmem:[%s255 + $0x10] sm:$0xff]
        %v568 = vld [vmem:[%s255 + $0x18] sm:$0xff]
        %v569 = vld [vmem:[%s255 + $0x20] sm:$0xff]
        %v570 = vld [vmem:[%s255 + $0x28] sm:$0xff]
        %v571 = vld [vmem:[%s255 + $0x30] sm:$0xff]
        %v572 = vld [vmem:[%s255 + $0x38] sm:$0xff]
        %v573 = vld [vmem:[%s3] sm:$0xff]
        %v574 = vld [vmem:[%s3 + $0x8] sm:$0xff]
        %v575 = vld [vmem:[%s3 + $0x10] sm:$0xff]
        %v576 = vld [vmem:[%s3 + $0x18] sm:$0xff]
        %v577 = vld [vmem:[%s3 + $0x20] sm:$0xff]
        %v578 = vld [vmem:[%s3 + $0x28] sm:$0xff]
        %v579 = vld [vmem:[%s3 + $0x30] sm:$0xff]
        %v580 = vld [vmem:[%s3 + $0x38] sm:$0xff]
        %v581 = vld [vmem:[%s3 + $0x40] sm:$0xff]
        %v582 = vld [vmem:[%s3 + $0x48] sm:$0xff]
        %v583 = vld [vmem:[%s3 + $0x50] sm:$0xff]
        %v584 = vld [vmem:[%s3 + $0x58] sm:$0xff]
        %v585 = vld [vmem:[%s3 + $0x60] sm:$0xff]
        %v586 = vld [vmem:[%s3 + $0x68] sm:$0xff]
        %v587 = vld [vmem:[%s3 + $0x70] sm:$0xff]
        %v588 = vld [vmem:[%s3 + $0x78] sm:$0xff]
        %vm589 = vcmask 523264
        %v591 = vsel %vm589, %v573, 0
        %v594 = vsel %vm589, %v574, 0
        %v597 = vsel %vm589, %v575, 0
        %v600 = vsel %vm589, %v576, 0
        %v603 = vsel %vm589, %v577, 0
        %v606 = vsel %vm589, %v578, 0
        %v609 = vsel %vm589, %v579, 0
        %v612 = vsel %vm589, %v580, 0
        %v615 = vsel %vm589, %v581, 0
        %v618 = vsel %vm589, %v582, 0
        %v621 = vsel %vm589, %v583, 0
        %v624 = vsel %vm589, %v584, 0
        %v627 = vsel %vm589, %v585, 0
        %v630 = vsel %vm589, %v586, 0
        %v633 = vsel %vm589, %v587, 0
        %v636 = vsel %vm589, %v588, 0
        %638 = vmatprep.subr.mxu0 0.0
        %639 = vmatpush1.msra.mxu0 0.0
        %640 = vmatprep.subr.mxu0 0.0
        %641 = vmatpush1.msra.mxu0 0.0
        %642 = vmatprep.subr.mxu0 0.0
        %643 = vmatpush1.msra.mxu0 0.0
        %644 = vmatprep.subr.mxu0 0.0
        %645 = vmatpush1.msra.mxu0 0.0
        %646 = vmatprep.subr.mxu0 0.0
        %647 = vmatpush1.msra.mxu0 0.0
        %648 = vmatprep.subr.mxu0 0.0
        %649 = vmatpush1.msra.mxu0 0.0
        %650 = vmatprep.subr.mxu0 0.0
        %651 = vmatpush1.msra.mxu0 0.0
        %652 = vmatprep.subr.mxu0 0.0
        %653 = vmatpush1.msra.mxu0 0.0
        %654 = vmatprep.subr.mxu0 0.0
        %655 = vmatpush1.msra.mxu0 %v572
        %656 = vmatprep.subr.mxu0 0.0
        %657 = vmatpush1.msra.mxu0 %v571
        %658 = vmatprep.subr.mxu0 0.0
        %659 = vmatpush1.msra.mxu0 %v570
        %660 = vmatprep.subr.mxu0 0.0
        %661 = vmatpush1.msra.mxu0 %v569
        %662 = vmatprep.subr.mxu0 0.0
        %663 = vmatpush1.msra.mxu0 %v568
        %664 = vmatprep.subr.mxu0 0.0
        %665 = vmatpush1.msra.mxu0 %v567
        %666 = vmatprep.subr.mxu0 0.0
        %667 = vmatpush1.msra.mxu0 %v566
        %668 = vmatprep.subr.mxu0 0.0
        %669 = vmatpush1.msra.mxu0 %v565
        %670 = vmatprep.subr.mxu0 0.0
        %671 = vmatpush2.msra.mxu0 0.0
        %672 = vmatprep.subr.mxu0 0.0
        %673 = vmatpush2.msra.mxu0 0.0
        %674 = vmatprep.subr.mxu0 0.0
        %675 = vmatpush2.msra.mxu0 0.0
        %676 = vmatprep.subr.mxu0 0.0
        %677 = vmatpush2.msra.mxu0 0.0
        %678 = vmatprep.subr.mxu0 0.0
        %679 = vmatpush2.msra.mxu0 0.0
        %680 = vmatprep.subr.mxu0 0.0
        %681 = vmatpush2.msra.mxu0 0.0
        %682 = vmatprep.subr.mxu0 0.0
        %683 = vmatpush2.msra.mxu0 0.0
        %684 = vmatprep.subr.mxu0 0.0
        %685 = vmatpush2.msra.mxu0 0.0
        %686 = vmatprep.subr.mxu0 0.0
        %687 = vmatpush2.msra.mxu0 0.0
        %688 = vmatprep.subr.mxu0 0.0
        %689 = vmatpush2.msra.mxu0 0.0
        %690 = vmatprep.subr.mxu0 0.0
        %691 = vmatpush2.msra.mxu0 0.0
        %692 = vmatprep.subr.mxu0 0.0
        %693 = vmatpush2.msra.mxu0 0.0
        %694 = vmatprep.subr.mxu0 0.0
        %695 = vmatpush2.msra.mxu0 0.0
        %696 = vmatprep.subr.mxu0 0.0
        %697 = vmatpush2.msra.mxu0 0.0
        %698 = vmatprep.subr.mxu0 0.0
        %699 = vmatpush2.msra.mxu0 0.0
        %700 = vmatprep.subr.mxu0 0.0
        %701 = vmatpush2.msra.mxu0 0.0
        %702 = vmatprep.mubr.f32.mxu0 0.0
        %703 = vmatmul.mubr.f32.gmra.mxu0 %v591
        %v704 = vpop.f32.mrf.mxu0
        %v705 = vadd.f32 0.0, %v704
        %v706 = vpop.f32.mrf.mxu0
        %707 = vmatprep.mubr.f32.mxu0 0.0
        %708 = vmatmul.mubr.f32.gmra.mxu0 %v594
        %v709 = vpop.f32.mrf.mxu0
        %v710 = vadd.f32 0.0, %v709
        %v711 = vpop.f32.mrf.mxu0
        %712 = vmatprep.mubr.f32.mxu0 0.0
        %713 = vmatmul.mubr.f32.gmra.mxu0 %v597
        %v714 = vpop.f32.mrf.mxu0
        %v715 = vadd.f32 0.0, %v714
        %v716 = vpop.f32.mrf.mxu0
        %717 = vmatprep.mubr.f32.mxu0 0.0
        %718 = vmatmul.mubr.f32.gmra.mxu0 %v600
        %v719 = vpop.f32.mrf.mxu0
        %v720 = vadd.f32 0.0, %v719
        %v721 = vpop.f32.mrf.mxu0
        %722 = vmatprep.mubr.f32.mxu0 0.0
        %723 = vmatmul.mubr.f32.gmra.mxu0 %v603
        %v724 = vpop.f32.mrf.mxu0
        %v725 = vadd.f32 0.0, %v724
        %v726 = vpop.f32.mrf.mxu0
        %727 = vmatprep.mubr.f32.mxu0 0.0
        %728 = vmatmul.mubr.f32.gmra.mxu0 %v606
        %v729 = vpop.f32.mrf.mxu0
        %v730 = vadd.f32 0.0, %v729
        %v731 = vpop.f32.mrf.mxu0
        %732 = vmatprep.mubr.f32.mxu0 0.0
        %733 = vmatmul.mubr.f32.gmra.mxu0 %v609
        %v734 = vpop.f32.mrf.mxu0
        %v735 = vadd.f32 0.0, %v734
        %v736 = vpop.f32.mrf.mxu0
        %737 = vmatprep.mubr.f32.mxu0 0.0
        %738 = vmatmul.mubr.f32.gmra.mxu0 %v612
        %v739 = vpop.f32.mrf.mxu0
        %v740 = vadd.f32 0.0, %v739
        %v741 = vpop.f32.mrf.mxu0
        %742 = vmatprep.mubr.f32.mxu0 0.0
        %743 = vmatmul.mubr.f32.gmra.mxu0 %v615
        %v744 = vpop.f32.mrf.mxu0
        %v745 = vadd.f32 0.0, %v744
        %v746 = vpop.f32.mrf.mxu0
        %747 = vmatprep.mubr.f32.mxu0 0.0
        %748 = vmatmul.mubr.f32.gmra.mxu0 %v618
        %v749 = vpop.f32.mrf.mxu0
        %v750 = vadd.f32 0.0, %v749
        %v751 = vpop.f32.mrf.mxu0
        %752 = vmatprep.mubr.f32.mxu0 0.0
        %753 = vmatmul.mubr.f32.gmra.mxu0 %v621
        %v754 = vpop.f32.mrf.mxu0
        %v755 = vadd.f32 0.0, %v754
        %v756 = vpop.f32.mrf.mxu0
        %757 = vmatprep.mubr.f32.mxu0 0.0
        %758 = vmatmul.mubr.f32.gmra.mxu0 %v624
        %v759 = vpop.f32.mrf.mxu0
        %v760 = vadd.f32 0.0, %v759
        %v761 = vpop.f32.mrf.mxu0
        %762 = vmatprep.mubr.f32.mxu0 0.0
        %763 = vmatmul.mubr.f32.gmra.mxu0 %v627
        %v764 = vpop.f32.mrf.mxu0
        %v765 = vadd.f32 0.0, %v764
        %v766 = vpop.f32.mrf.mxu0
        %767 = vmatprep.mubr.f32.mxu0 0.0
        %768 = vmatmul.mubr.f32.gmra.mxu0 %v630
        %v769 = vpop.f32.mrf.mxu0
        %v770 = vadd.f32 0.0, %v769
        %v771 = vpop.f32.mrf.mxu0
        %772 = vmatprep.mubr.f32.mxu0 0.0
        %773 = vmatmul.mubr.f32.gmra.mxu0 %v633
        %v774 = vpop.f32.mrf.mxu0
        %v775 = vadd.f32 0.0, %v774
        %v776 = vpop.f32.mrf.mxu0
        %777 = vmatprep.mubr.f32.mxu0 0.0
        %778 = vmatmul.mubr.f32.gmra.mxu0 %v636
        %v779 = vpop.f32.mrf.mxu0
        %v780 = vadd.f32 0.0, %v779
        %v781 = vpop.f32.mrf.mxu0
        %782 = vdwg.mxu0
        %vm783 = vcmp.eq.f32.partialorder %v487, 0.0
        %vm784 = vcmp.eq.f32.partialorder %v492, 0.0
        %vm785 = vcmp.eq.f32.partialorder %v497, 0.0
        %vm786 = vcmp.eq.f32.partialorder %v502, 0.0
        %vm787 = vcmp.eq.f32.partialorder %v507, 0.0
        %vm788 = vcmp.eq.f32.partialorder %v512, 0.0
        %vm789 = vcmp.eq.f32.partialorder %v517, 0.0
        %vm790 = vcmp.eq.f32.partialorder %v522, 0.0
        %vm791 = vcmp.eq.f32.partialorder %v527, 0.0
        %vm792 = vcmp.eq.f32.partialorder %v532, 0.0
        %vm793 = vcmp.eq.f32.partialorder %v537, 0.0
        %vm794 = vcmp.eq.f32.partialorder %v542, 0.0
        %vm795 = vcmp.eq.f32.partialorder %v547, 0.0
        %vm796 = vcmp.eq.f32.partialorder %v552, 0.0
        %vm797 = vcmp.eq.f32.partialorder %v557, 0.0
        %vm798 = vcmp.eq.f32.partialorder %v562, 0.0
        %v799 = vsel %vm783, -1e+10, %v705
        %v800 = vsel %vm784, -1e+10, %v710
        %v801 = vsel %vm785, -1e+10, %v715
        %v802 = vsel %vm786, -1e+10, %v720
        %v803 = vsel %vm787, -1e+10, %v725
        %v804 = vsel %vm788, -1e+10, %v730
        %v805 = vsel %vm789, -1e+10, %v735
        %v806 = vsel %vm790, -1e+10, %v740
        %v807 = vsel %vm791, -1e+10, %v745
        %v808 = vsel %vm792, -1e+10, %v750
        %v809 = vsel %vm793, -1e+10, %v755
        %v810 = vsel %vm794, -1e+10, %v760
        %v811 = vsel %vm795, -1e+10, %v765
        %v812 = vsel %vm796, -1e+10, %v770
        %v813 = vsel %vm797, -1e+10, %v775
        %v814 = vsel %vm798, -1e+10, %v780
        %v815 = vsel %vm371, %v799, -inf
        %816 = vmax.xlane.f32.xlu0 %v815
        %v817 = vpop.xlane.xlu0 %816
        %v818 = vsel %vm371, %v800, -inf
        %819 = vmax.xlane.f32.xlu0 %v818
        %v820 = vpop.xlane.xlu0 %819
        %v821 = vsel %vm371, %v801, -inf
        %822 = vmax.xlane.f32.xlu0 %v821
        %v823 = vpop.xlane.xlu0 %822
        %v824 = vsel %vm371, %v802, -inf
        %825 = vmax.xlane.f32.xlu0 %v824
        %v826 = vpop.xlane.xlu0 %825
        %v827 = vsel %vm371, %v803, -inf
        %828 = vmax.xlane.f32.xlu0 %v827
        %v829 = vpop.xlane.xlu0 %828
        %v830 = vsel %vm371, %v804, -inf
        %831 = vmax.xlane.f32.xlu0 %v830
        %v832 = vpop.xlane.xlu0 %831
        %v833 = vsel %vm371, %v805, -inf
        %834 = vmax.xlane.f32.xlu0 %v833
        %v835 = vpop.xlane.xlu0 %834
        %v836 = vsel %vm371, %v806, -inf
        %837 = vmax.xlane.f32.xlu0 %v836
        %v838 = vpop.xlane.xlu0 %837
        %v839 = vsel %vm371, %v807, -inf
        %840 = vmax.xlane.f32.xlu0 %v839
        %v841 = vpop.xlane.xlu0 %840
        %v842 = vsel %vm371, %v808, -inf
        %843 = vmax.xlane.f32.xlu0 %v842
        %v844 = vpop.xlane.xlu0 %843
        %v845 = vsel %vm371, %v809, -inf
        %846 = vmax.xlane.f32.xlu0 %v845
        %v847 = vpop.xlane.xlu0 %846
        %v848 = vsel %vm371, %v810, -inf
        %849 = vmax.xlane.f32.xlu0 %v848
        %v850 = vpop.xlane.xlu0 %849
        %v851 = vsel %vm371, %v811, -inf
        %852 = vmax.xlane.f32.xlu0 %v851
        %v853 = vpop.xlane.xlu0 %852
        %v854 = vsel %vm371, %v812, -inf
        %855 = vmax.xlane.f32.xlu0 %v854
        %v856 = vpop.xlane.xlu0 %855
        %v857 = vsel %vm371, %v813, -inf
        %858 = vmax.xlane.f32.xlu0 %v857
        %v859 = vpop.xlane.xlu0 %858
        %v860 = vsel %vm371, %v814, -inf
        %861 = vmax.xlane.f32.xlu0 %v860
        %v862 = vpop.xlane.xlu0 %861
        %v863 = vsub.f32 %v799, %v817
        %v864 = vsub.f32 %v800, %v820
        %v865 = vsub.f32 %v801, %v823
        %v866 = vsub.f32 %v802, %v826
        %v867 = vsub.f32 %v803, %v829
        %v868 = vsub.f32 %v804, %v832
        %v869 = vsub.f32 %v805, %v835
        %v870 = vsub.f32 %v806, %v838
        %v871 = vsub.f32 %v807, %v841
        %v872 = vsub.f32 %v808, %v844
        %v873 = vsub.f32 %v809, %v847
        %v874 = vsub.f32 %v810, %v850
        %v875 = vsub.f32 %v811, %v853
        %v876 = vsub.f32 %v812, %v856
        %v877 = vsub.f32 %v813, %v859
        %v878 = vsub.f32 %v814, %v862
        %v879 = vmul.f32 %v863, 1.442695
        %v880 = vpow.pop %v879
        %v881 = vmul.f32 %v864, 1.442695
        %v882 = vpow.pop %v881
        %v883 = vmul.f32 %v865, 1.442695
        %v884 = vpow.pop %v883
        %v885 = vmul.f32 %v866, 1.442695
        %v886 = vpow.pop %v885
        %v887 = vmul.f32 %v867, 1.442695
        %v888 = vpow.pop %v887
        %v889 = vmul.f32 %v868, 1.442695
        %v890 = vpow.pop %v889
        %v891 = vmul.f32 %v869, 1.442695
        %v892 = vpow.pop %v891
        %v893 = vmul.f32 %v870, 1.442695
        %v894 = vpow.pop %v893
        %v895 = vmul.f32 %v871, 1.442695
        %v896 = vpow.pop %v895
        %v897 = vmul.f32 %v872, 1.442695
        %v898 = vpow.pop %v897
        %v899 = vmul.f32 %v873, 1.442695
        %v900 = vpow.pop %v899
        %v901 = vmul.f32 %v874, 1.442695
        %v902 = vpow.pop %v901
        %v903 = vmul.f32 %v875, 1.442695
        %v904 = vpow.pop %v903
        %v905 = vmul.f32 %v876, 1.442695
        %v906 = vpow.pop %v905
        %v907 = vmul.f32 %v877, 1.442695
        %v908 = vpow.pop %v907
        %v909 = vmul.f32 %v878, 1.442695
        %v910 = vpow.pop %v909
        %v911 = vsel %vm371, %v880, 0.0
        %912 = vadd.xlane.f32.xlu0 %v911
        %v913 = vpop.xlane.xlu0 %912
        %v914 = vsel %vm371, %v882, 0.0
        %915 = vadd.xlane.f32.xlu0 %v914
        %v916 = vpop.xlane.xlu0 %915
        %v917 = vsel %vm371, %v884, 0.0
        %918 = vadd.xlane.f32.xlu0 %v917
        %v919 = vpop.xlane.xlu0 %918
        %v920 = vsel %vm371, %v886, 0.0
        %921 = vadd.xlane.f32.xlu0 %v920
        %v922 = vpop.xlane.xlu0 %921
        %v923 = vsel %vm371, %v888, 0.0
        %924 = vadd.xlane.f32.xlu0 %v923
        %v925 = vpop.xlane.xlu0 %924
        %v926 = vsel %vm371, %v890, 0.0
        %927 = vadd.xlane.f32.xlu0 %v926
        %v928 = vpop.xlane.xlu0 %927
        %v929 = vsel %vm371, %v892, 0.0
        %930 = vadd.xlane.f32.xlu0 %v929
        %v931 = vpop.xlane.xlu0 %930
        %v932 = vsel %vm371, %v894, 0.0
        %933 = vadd.xlane.f32.xlu0 %v932
        %v934 = vpop.xlane.xlu0 %933
        %v935 = vsel %vm371, %v896, 0.0
        %936 = vadd.xlane.f32.xlu0 %v935
        %v937 = vpop.xlane.xlu0 %936
        %v938 = vsel %vm371, %v898, 0.0
        %939 = vadd.xlane.f32.xlu0 %v938
        %v940 = vpop.xlane.xlu0 %939
        %v941 = vsel %vm371, %v900, 0.0
        %942 = vadd.xlane.f32.xlu0 %v941
        %v943 = vpop.xlane.xlu0 %942
        %v944 = vsel %vm371, %v902, 0.0
        %945 = vadd.xlane.f32.xlu0 %v944
        %v946 = vpop.xlane.xlu0 %945
        %v947 = vsel %vm371, %v904, 0.0
        %948 = vadd.xlane.f32.xlu0 %v947
        %v949 = vpop.xlane.xlu0 %948
        %v950 = vsel %vm371, %v906, 0.0
        %951 = vadd.xlane.f32.xlu0 %v950
        %v952 = vpop.xlane.xlu0 %951
        %v953 = vsel %vm371, %v908, 0.0
        %954 = vadd.xlane.f32.xlu0 %v953
        %v955 = vpop.xlane.xlu0 %954
        %v956 = vsel %vm371, %v910, 0.0
        %957 = vadd.xlane.f32.xlu0 %v956
        %v958 = vpop.xlane.xlu0 %957
        %v959 = vrcp.pop %v913
        %v960 = vrcp.pop %v916
        %v961 = vrcp.pop %v919
        %v962 = vrcp.pop %v922
        %v963 = vrcp.pop %v925
        %v964 = vrcp.pop %v928
        %v965 = vrcp.pop %v931
        %v966 = vrcp.pop %v934
        %v967 = vrcp.pop %v937
        %v968 = vrcp.pop %v940
        %v969 = vrcp.pop %v943
        %v970 = vrcp.pop %v946
        %v971 = vrcp.pop %v949
        %v972 = vrcp.pop %v952
        %v973 = vrcp.pop %v955
        %v974 = vrcp.pop %v958
        %v975 = vmul.f32 %v880, %v959
        %v976 = vmul.f32 %v882, %v960
        %v977 = vmul.f32 %v884, %v961
        %v978 = vmul.f32 %v886, %v962
        %v979 = vmul.f32 %v888, %v963
        %v980 = vmul.f32 %v890, %v964
        %v981 = vmul.f32 %v892, %v965
        %v982 = vmul.f32 %v894, %v966
        %v983 = vmul.f32 %v896, %v967
        %v984 = vmul.f32 %v898, %v968
        %v985 = vmul.f32 %v900, %v969
        %v986 = vmul.f32 %v902, %v970
        %v987 = vmul.f32 %v904, %v971
        %v988 = vmul.f32 %v906, %v972
        %v989 = vmul.f32 %v908, %v973
        %v990 = vmul.f32 %v910, %v974
        %v991 = vmul.f32 %v975, %v487
        %v992 = vmul.f32 %v976, %v492
        %v993 = vmul.f32 %v977, %v497
        %v994 = vmul.f32 %v978, %v502
        %v995 = vmul.f32 %v979, %v507
        %v996 = vmul.f32 %v980, %v512
        %v997 = vmul.f32 %v981, %v517
        %v998 = vmul.f32 %v982, %v522
        %v999 = vmul.f32 %v983, %v527
        %v1000 = vmul.f32 %v984, %v532
        %v1001 = vmul.f32 %v985, %v537
        %v1002 = vmul.f32 %v986, %v542
        %v1003 = vmul.f32 %v987, %v547
        %v1004 = vmul.f32 %v988, %v552
        %v1005 = vmul.f32 %v989, %v557
        %v1006 = vmul.f32 %v990, %v562
        %v1007 = vld [vmem:[%s259] sm:$0xf]
        %v1008 = vld [vmem:[%s4] sm:$0xff]
        %v1009 = vld [vmem:[%s4 + $0x8] sm:$0xff]
        %v1010 = vld [vmem:[%s4 + $0x10] sm:$0xff]
        %v1011 = vld [vmem:[%s4 + $0x18] sm:$0xff]
        %v1012 = vld [vmem:[%s4 + $0x20] sm:$0xff]
        %v1013 = vld [vmem:[%s4 + $0x28] sm:$0xff]
        %v1014 = vld [vmem:[%s4 + $0x30] sm:$0xff]
        %v1015 = vld [vmem:[%s4 + $0x38] sm:$0xff]
        %v1016 = vld [vmem:[%s4 + $0x40] sm:$0xff]
        %v1017 = vld [vmem:[%s4 + $0x48] sm:$0xff]
        %v1018 = vld [vmem:[%s4 + $0x50] sm:$0xff]
        %v1019 = vld [vmem:[%s4 + $0x58] sm:$0xff]
        %v1020 = vld [vmem:[%s4 + $0x60] sm:$0xff]
        %v1021 = vld [vmem:[%s4 + $0x68] sm:$0xff]
        %v1022 = vld [vmem:[%s4 + $0x70] sm:$0xff]
        %v1023 = vld [vmem:[%s4 + $0x78] sm:$0xff]
        %v1024 = vld [vmem:[%s4 + $0x80] sm:$0xff]
        %v1025 = vld [vmem:[%s4 + $0x88] sm:$0xff]
        %v1026 = vld [vmem:[%s4 + $0x90] sm:$0xff]
        %v1027 = vld [vmem:[%s4 + $0x98] sm:$0xff]
        %v1028 = vld [vmem:[%s4 + $0xa0] sm:$0xff]
        %v1029 = vld [vmem:[%s4 + $0xa8] sm:$0xff]
        %v1030 = vld [vmem:[%s4 + $0xb0] sm:$0xff]
        %v1031 = vld [vmem:[%s4 + $0xb8] sm:$0xff]
        %v1032 = vld [vmem:[%s4 + $0xc0] sm:$0xff]
        %v1033 = vld [vmem:[%s4 + $0xc8] sm:$0xff]
        %v1034 = vld [vmem:[%s4 + $0xd0] sm:$0xff]
        %v1035 = vld [vmem:[%s4 + $0xd8] sm:$0xff]
        %v1036 = vld [vmem:[%s4 + $0xe0] sm:$0xff]
        %v1037 = vld [vmem:[%s4 + $0xe8] sm:$0xff]
        %v1038 = vld [vmem:[%s4 + $0xf0] sm:$0xff]
        %v1039 = vld [vmem:[%s4 + $0xf8] sm:$0xff]
        %vm1040 = vcmask 31744
        %v1042 = vsel %vm1040, %v1008, 0
        %v1045 = vsel %vm1040, %v1009, 0
        %v1048 = vsel %vm1040, %v1010, 0
        %v1051 = vsel %vm1040, %v1011, 0
        %v1054 = vsel %vm1040, %v1012, 0
        %v1057 = vsel %vm1040, %v1013, 0
        %v1060 = vsel %vm1040, %v1014, 0
        %v1063 = vsel %vm1040, %v1015, 0
        %v1066 = vsel %vm1040, %v1016, 0
        %v1069 = vsel %vm1040, %v1017, 0
        %v1072 = vsel %vm1040, %v1018, 0
        %v1075 = vsel %vm1040, %v1019, 0
        %v1078 = vsel %vm1040, %v1020, 0
        %v1081 = vsel %vm1040, %v1021, 0
        %v1084 = vsel %vm1040, %v1022, 0
        %v1087 = vsel %vm1040, %v1023, 0
        %v1090 = vsel %vm1040, %v1024, 0
        %v1093 = vsel %vm1040, %v1025, 0
        %v1096 = vsel %vm1040, %v1026, 0
        %v1099 = vsel %vm1040, %v1027, 0
        %v1102 = vsel %vm1040, %v1028, 0
        %v1105 = vsel %vm1040, %v1029, 0
        %v1108 = vsel %vm1040, %v1030, 0
        %v1111 = vsel %vm1040, %v1031, 0
        %v1114 = vsel %vm1040, %v1032, 0
        %v1117 = vsel %vm1040, %v1033, 0
        %v1120 = vsel %vm1040, %v1034, 0
        %v1123 = vsel %vm1040, %v1035, 0
        %v1126 = vsel %vm1040, %v1036, 0
        %v1129 = vsel %vm1040, %v1037, 0
        %v1132 = vsel %vm1040, %v1038, 0
        %v1135 = vsel %vm1040, %v1039, 0
        %vm1137 = vcmask 1043456
        %v1139 = vsel %vm1137, %v1007, 0
        %1141 = vmatprep.subr.mxu0 0.0
        %1142 = vmatpush1.msra.mxu0 0.0
        %1143 = vmatprep.subr.mxu0 0.0
        %1144 = vmatpush1.msra.mxu0 0.0
        %1145 = vmatprep.subr.mxu0 0.0
        %1146 = vmatpush1.msra.mxu0 0.0
        %1147 = vmatprep.subr.mxu0 0.0
        %1148 = vmatpush1.msra.mxu0 0.0
        %1149 = vmatprep.subr.mxu0 0.0
        %1150 = vmatpush1.msra.mxu0 0.0
        %1151 = vmatprep.subr.mxu0 0.0
        %1152 = vmatpush1.msra.mxu0 0.0
        %1153 = vmatprep.subr.mxu0 0.0
        %1154 = vmatpush1.msra.mxu0 0.0
        %1155 = vmatprep.subr.mxu0 0.0
        %1156 = vmatpush1.msra.mxu0 0.0
        %1157 = vmatprep.subr.mxu0 0.0
        %1158 = vmatpush1.msra.mxu0 0.0
        %1159 = vmatprep.subr.mxu0 0.0
        %1160 = vmatpush1.msra.mxu0 0.0
        %1161 = vmatprep.subr.mxu0 0.0
        %1162 = vmatpush1.msra.mxu0 0.0
        %1163 = vmatprep.subr.mxu0 0.0
        %1164 = vmatpush1.msra.mxu0 0.0
        %1165 = vmatprep.subr.mxu0 0.0
        %1166 = vmatpush1.msra.mxu0 0.0
        %1167 = vmatprep.subr.mxu0 0.0
        %1168 = vmatpush1.msra.mxu0 0.0
        %1169 = vmatprep.subr.mxu0 0.0
        %1170 = vmatpush1.msra.mxu0 0.0
        %1171 = vmatprep.subr.mxu0 0.0
        %1172 = vmatpush1.msra.mxu0 %v1139
        %1173 = vmatprep.subr.mxu0 0.0
        %1174 = vmatpush2.msra.mxu0 0.0
        %1175 = vmatprep.subr.mxu0 0.0
        %1176 = vmatpush2.msra.mxu0 0.0
        %1177 = vmatprep.subr.mxu0 0.0
        %1178 = vmatpush2.msra.mxu0 0.0
        %1179 = vmatprep.subr.mxu0 0.0
        %1180 = vmatpush2.msra.mxu0 0.0
        %1181 = vmatprep.subr.mxu0 0.0
        %1182 = vmatpush2.msra.mxu0 0.0
        %1183 = vmatprep.subr.mxu0 0.0
        %1184 = vmatpush2.msra.mxu0 0.0
        %1185 = vmatprep.subr.mxu0 0.0
        %1186 = vmatpush2.msra.mxu0 0.0
        %1187 = vmatprep.subr.mxu0 0.0
        %1188 = vmatpush2.msra.mxu0 0.0
        %1189 = vmatprep.subr.mxu0 0.0
        %1190 = vmatpush2.msra.mxu0 0.0
        %1191 = vmatprep.subr.mxu0 0.0
        %1192 = vmatpush2.msra.mxu0 0.0
        %1193 = vmatprep.subr.mxu0 0.0
        %1194 = vmatpush2.msra.mxu0 0.0
        %1195 = vmatprep.subr.mxu0 0.0
        %1196 = vmatpush2.msra.mxu0 0.0
        %1197 = vmatprep.subr.mxu0 0.0
        %1198 = vmatpush2.msra.mxu0 0.0
        %1199 = vmatprep.subr.mxu0 0.0
        %1200 = vmatpush2.msra.mxu0 0.0
        %1201 = vmatprep.subr.mxu0 0.0
        %1202 = vmatpush2.msra.mxu0 0.0
        %1203 = vmatprep.subr.mxu0 0.0
        %1204 = vmatpush2.msra.mxu0 0.0
        %1205 = vmatprep.mubr.f32.mxu0 0.0
        %1206 = vmatmul.mubr.f32.gmra.mxu0 %v1042
        %v1207 = vpop.f32.mrf.mxu0
        %v1208 = vadd.f32 0.0, %v1207
        %v1209 = vpop.f32.mrf.mxu0
        %1210 = vmatprep.mubr.f32.mxu0 0.0
        %1211 = vmatmul.mubr.f32.gmra.mxu0 %v1045
        %v1212 = vpop.f32.mrf.mxu0
        %v1213 = vadd.f32 0.0, %v1212
        %v1214 = vpop.f32.mrf.mxu0
        %1215 = vmatprep.mubr.f32.mxu0 0.0
        %1216 = vmatmul.mubr.f32.gmra.mxu0 %v1048
        %v1217 = vpop.f32.mrf.mxu0
        %v1218 = vadd.f32 0.0, %v1217
        %v1219 = vpop.f32.mrf.mxu0
        %1220 = vmatprep.mubr.f32.mxu0 0.0
        %1221 = vmatmul.mubr.f32.gmra.mxu0 %v1051
        %v1222 = vpop.f32.mrf.mxu0
        %v1223 = vadd.f32 0.0, %v1222
        %v1224 = vpop.f32.mrf.mxu0
        %1225 = vmatprep.mubr.f32.mxu0 0.0
        %1226 = vmatmul.mubr.f32.gmra.mxu0 %v1054
        %v1227 = vpop.f32.mrf.mxu0
        %v1228 = vadd.f32 0.0, %v1227
        %v1229 = vpop.f32.mrf.mxu0
        %1230 = vmatprep.mubr.f32.mxu0 0.0
        %1231 = vmatmul.mubr.f32.gmra.mxu0 %v1057
        %v1232 = vpop.f32.mrf.mxu0
        %v1233 = vadd.f32 0.0, %v1232
        %v1234 = vpop.f32.mrf.mxu0
        %1235 = vmatprep.mubr.f32.mxu0 0.0
        %1236 = vmatmul.mubr.f32.gmra.mxu0 %v1060
        %v1237 = vpop.f32.mrf.mxu0
        %v1238 = vadd.f32 0.0, %v1237
        %v1239 = vpop.f32.mrf.mxu0
        %1240 = vmatprep.mubr.f32.mxu0 0.0
        %1241 = vmatmul.mubr.f32.gmra.mxu0 %v1063
        %v1242 = vpop.f32.mrf.mxu0
        %v1243 = vadd.f32 0.0, %v1242
        %v1244 = vpop.f32.mrf.mxu0
        %1245 = vmatprep.mubr.f32.mxu0 0.0
        %1246 = vmatmul.mubr.f32.gmra.mxu0 %v1066
        %v1247 = vpop.f32.mrf.mxu0
        %v1248 = vadd.f32 0.0, %v1247
        %v1249 = vpop.f32.mrf.mxu0
        %1250 = vmatprep.mubr.f32.mxu0 0.0
        %1251 = vmatmul.mubr.f32.gmra.mxu0 %v1069
        %v1252 = vpop.f32.mrf.mxu0
        %v1253 = vadd.f32 0.0, %v1252
        %v1254 = vpop.f32.mrf.mxu0
        %1255 = vmatprep.mubr.f32.mxu0 0.0
        %1256 = vmatmul.mubr.f32.gmra.mxu0 %v1072
        %v1257 = vpop.f32.mrf.mxu0
        %v1258 = vadd.f32 0.0, %v1257
        %v1259 = vpop.f32.mrf.mxu0
        %1260 = vmatprep.mubr.f32.mxu0 0.0
        %1261 = vmatmul.mubr.f32.gmra.mxu0 %v1075
        %v1262 = vpop.f32.mrf.mxu0
        %v1263 = vadd.f32 0.0, %v1262
        %v1264 = vpop.f32.mrf.mxu0
        %1265 = vmatprep.mubr.f32.mxu0 0.0
        %1266 = vmatmul.mubr.f32.gmra.mxu0 %v1078
        %v1267 = vpop.f32.mrf.mxu0
        %v1268 = vadd.f32 0.0, %v1267
        %v1269 = vpop.f32.mrf.mxu0
        %1270 = vmatprep.mubr.f32.mxu0 0.0
        %1271 = vmatmul.mubr.f32.gmra.mxu0 %v1081
        %v1272 = vpop.f32.mrf.mxu0
        %v1273 = vadd.f32 0.0, %v1272
        %v1274 = vpop.f32.mrf.mxu0
        %1275 = vmatprep.mubr.f32.mxu0 0.0
        %1276 = vmatmul.mubr.f32.gmra.mxu0 %v1084
        %v1277 = vpop.f32.mrf.mxu0
        %v1278 = vadd.f32 0.0, %v1277
        %v1279 = vpop.f32.mrf.mxu0
        %1280 = vmatprep.mubr.f32.mxu0 0.0
        %1281 = vmatmul.mubr.f32.gmra.mxu0 %v1087
        %v1282 = vpop.f32.mrf.mxu0
        %v1283 = vadd.f32 0.0, %v1282
        %v1284 = vpop.f32.mrf.mxu0
        %1285 = vmatprep.mubr.f32.mxu0 0.0
        %1286 = vmatmul.mubr.f32.gmra.mxu0 %v1090
        %v1287 = vpop.f32.mrf.mxu0
        %v1288 = vadd.f32 0.0, %v1287
        %v1289 = vpop.f32.mrf.mxu0
        %1290 = vmatprep.mubr.f32.mxu0 0.0
        %1291 = vmatmul.mubr.f32.gmra.mxu0 %v1093
        %v1292 = vpop.f32.mrf.mxu0
        %v1293 = vadd.f32 0.0, %v1292
        %v1294 = vpop.f32.mrf.mxu0
        %1295 = vmatprep.mubr.f32.mxu0 0.0
        %1296 = vmatmul.mubr.f32.gmra.mxu0 %v1096
        %v1297 = vpop.f32.mrf.mxu0
        %v1298 = vadd.f32 0.0, %v1297
        %v1299 = vpop.f32.mrf.mxu0
        %1300 = vmatprep.mubr.f32.mxu0 0.0
        %1301 = vmatmul.mubr.f32.gmra.mxu0 %v1099
        %v1302 = vpop.f32.mrf.mxu0
        %v1303 = vadd.f32 0.0, %v1302
        %v1304 = vpop.f32.mrf.mxu0
        %1305 = vmatprep.mubr.f32.mxu0 0.0
        %1306 = vmatmul.mubr.f32.gmra.mxu0 %v1102
        %v1307 = vpop.f32.mrf.mxu0
        %v1308 = vadd.f32 0.0, %v1307
        %v1309 = vpop.f32.mrf.mxu0
        %1310 = vmatprep.mubr.f32.mxu0 0.0
        %1311 = vmatmul.mubr.f32.gmra.mxu0 %v1105
        %v1312 = vpop.f32.mrf.mxu0
        %v1313 = vadd.f32 0.0, %v1312
        %v1314 = vpop.f32.mrf.mxu0
        %1315 = vmatprep.mubr.f32.mxu0 0.0
        %1316 = vmatmul.mubr.f32.gmra.mxu0 %v1108
        %v1317 = vpop.f32.mrf.mxu0
        %v1318 = vadd.f32 0.0, %v1317
        %v1319 = vpop.f32.mrf.mxu0
        %1320 = vmatprep.mubr.f32.mxu0 0.0
        %1321 = vmatmul.mubr.f32.gmra.mxu0 %v1111
        %v1322 = vpop.f32.mrf.mxu0
        %v1323 = vadd.f32 0.0, %v1322
        %v1324 = vpop.f32.mrf.mxu0
        %1325 = vmatprep.mubr.f32.mxu0 0.0
        %1326 = vmatmul.mubr.f32.gmra.mxu0 %v1114
        %v1327 = vpop.f32.mrf.mxu0
        %v1328 = vadd.f32 0.0, %v1327
        %v1329 = vpop.f32.mrf.mxu0
        %1330 = vmatprep.mubr.f32.mxu0 0.0
        %1331 = vmatmul.mubr.f32.gmra.mxu0 %v1117
        %v1332 = vpop.f32.mrf.mxu0
        %v1333 = vadd.f32 0.0, %v1332
        %v1334 = vpop.f32.mrf.mxu0
        %1335 = vmatprep.mubr.f32.mxu0 0.0
        %1336 = vmatmul.mubr.f32.gmra.mxu0 %v1120
        %v1337 = vpop.f32.mrf.mxu0
        %v1338 = vadd.f32 0.0, %v1337
        %v1339 = vpop.f32.mrf.mxu0
        %1340 = vmatprep.mubr.f32.mxu0 0.0
        %1341 = vmatmul.mubr.f32.gmra.mxu0 %v1123
        %v1342 = vpop.f32.mrf.mxu0
        %v1343 = vadd.f32 0.0, %v1342
        %v1344 = vpop.f32.mrf.mxu0
        %1345 = vmatprep.mubr.f32.mxu0 0.0
        %1346 = vmatmul.mubr.f32.gmra.mxu0 %v1126
        %v1347 = vpop.f32.mrf.mxu0
        %v1348 = vadd.f32 0.0, %v1347
        %v1349 = vpop.f32.mrf.mxu0
        %1350 = vmatprep.mubr.f32.mxu0 0.0
        %1351 = vmatmul.mubr.f32.gmra.mxu0 %v1129
        %v1352 = vpop.f32.mrf.mxu0
        %v1353 = vadd.f32 0.0, %v1352
        %v1354 = vpop.f32.mrf.mxu0
        %1355 = vmatprep.mubr.f32.mxu0 0.0
        %1356 = vmatmul.mubr.f32.gmra.mxu0 %v1132
        %v1357 = vpop.f32.mrf.mxu0
        %v1358 = vadd.f32 0.0, %v1357
        %v1359 = vpop.f32.mrf.mxu0
        %1360 = vmatprep.mubr.f32.mxu0 0.0
        %1361 = vmatmul.mubr.f32.gmra.mxu0 %v1135
        %v1362 = vpop.f32.mrf.mxu0
        %v1363 = vadd.f32 0.0, %v1362
        %v1364 = vpop.f32.mrf.mxu0
        %1365 = vdwg.mxu0
        %v1366 = vsub.f32 %v1208, %v1288
        %v1367 = vsub.f32 %v1213, %v1293
        %v1368 = vsub.f32 %v1218, %v1298
        %v1369 = vsub.f32 %v1223, %v1303
        %v1370 = vsub.f32 %v1228, %v1308
        %v1371 = vsub.f32 %v1233, %v1313
        %v1372 = vsub.f32 %v1238, %v1318
        %v1373 = vsub.f32 %v1243, %v1323
        %v1374 = vsub.f32 %v1248, %v1328
        %v1375 = vsub.f32 %v1253, %v1333
        %v1376 = vsub.f32 %v1258, %v1338
        %v1377 = vsub.f32 %v1263, %v1343
        %v1378 = vsub.f32 %v1268, %v1348
        %v1379 = vsub.f32 %v1273, %v1353
        %v1380 = vsub.f32 %v1278, %v1358
        %v1381 = vsub.f32 %v1283, %v1363
        %v1382 = vmul.f32 %v355, %v1366
        %v1383 = vmul.f32 %v356, %v1367
        %v1384 = vmul.f32 %v357, %v1368
        %v1385 = vmul.f32 %v358, %v1369
        %v1386 = vmul.f32 %v359, %v1370
        %v1387 = vmul.f32 %v360, %v1371
        %v1388 = vmul.f32 %v361, %v1372
        %v1389 = vmul.f32 %v362, %v1373
        %v1390 = vmul.f32 %v363, %v1374
        %v1391 = vmul.f32 %v364, %v1375
        %v1392 = vmul.f32 %v365, %v1376
        %v1393 = vmul.f32 %v366, %v1377
        %v1394 = vmul.f32 %v367, %v1378
        %v1395 = vmul.f32 %v368, %v1379
        %v1396 = vmul.f32 %v369, %v1380
        %v1397 = vmul.f32 %v370, %v1381
        %v1398 = vadd.f32 %v1288, %v1382
        %v1399 = vadd.f32 %v1293, %v1383
        %v1400 = vadd.f32 %v1298, %v1384
        %v1401 = vadd.f32 %v1303, %v1385
        %v1402 = vadd.f32 %v1308, %v1386
        %v1403 = vadd.f32 %v1313, %v1387
        %v1404 = vadd.f32 %v1318, %v1388
        %v1405 = vadd.f32 %v1323, %v1389
        %v1406 = vadd.f32 %v1328, %v1390
        %v1407 = vadd.f32 %v1333, %v1391
        %v1408 = vadd.f32 %v1338, %v1392
        %v1409 = vadd.f32 %v1343, %v1393
        %v1410 = vadd.f32 %v1348, %v1394
        %v1411 = vadd.f32 %v1353, %v1395
        %v1412 = vadd.f32 %v1358, %v1396
        %v1413 = vadd.f32 %v1363, %v1397
        %v1414 = vmul.f32 %v1398, %v991
        %v1415 = vmul.f32 %v1399, %v992
        %v1416 = vmul.f32 %v1400, %v993
        %v1417 = vmul.f32 %v1401, %v994
        %v1418 = vmul.f32 %v1402, %v995
        %v1419 = vmul.f32 %v1403, %v996
        %v1420 = vmul.f32 %v1404, %v997
        %v1421 = vmul.f32 %v1405, %v998
        %v1422 = vmul.f32 %v1406, %v999
        %v1423 = vmul.f32 %v1407, %v1000
        %v1424 = vmul.f32 %v1408, %v1001
        %v1425 = vmul.f32 %v1409, %v1002
        %v1426 = vmul.f32 %v1410, %v1003
        %v1427 = vmul.f32 %v1411, %v1004
        %v1428 = vmul.f32 %v1412, %v1005
        %v1429 = vmul.f32 %v1413, %v1006
        %v1430 = vsel %vm371, %v1414, 0.0
        %1431 = vadd.xlane.f32.xlu0 %v1430
        %v1432 = vpop.xlane.xlu0 %1431
        %v1433 = vsel %vm371, %v1415, 0.0
        %1434 = vadd.xlane.f32.xlu0 %v1433
        %v1435 = vpop.xlane.xlu0 %1434
        %v1436 = vsel %vm371, %v1416, 0.0
        %1437 = vadd.xlane.f32.xlu0 %v1436
        %v1438 = vpop.xlane.xlu0 %1437
        %v1439 = vsel %vm371, %v1417, 0.0
        %1440 = vadd.xlane.f32.xlu0 %v1439
        %v1441 = vpop.xlane.xlu0 %1440
        %v1442 = vsel %vm371, %v1418, 0.0
        %1443 = vadd.xlane.f32.xlu0 %v1442
        %v1444 = vpop.xlane.xlu0 %1443
        %v1445 = vsel %vm371, %v1419, 0.0
        %1446 = vadd.xlane.f32.xlu0 %v1445
        %v1447 = vpop.xlane.xlu0 %1446
        %v1448 = vsel %vm371, %v1420, 0.0
        %1449 = vadd.xlane.f32.xlu0 %v1448
        %v1450 = vpop.xlane.xlu0 %1449
        %v1451 = vsel %vm371, %v1421, 0.0
        %1452 = vadd.xlane.f32.xlu0 %v1451
        %v1453 = vpop.xlane.xlu0 %1452
        %v1454 = vsel %vm371, %v1422, 0.0
        %1455 = vadd.xlane.f32.xlu0 %v1454
        %v1456 = vpop.xlane.xlu0 %1455
        %v1457 = vsel %vm371, %v1423, 0.0
        %1458 = vadd.xlane.f32.xlu0 %v1457
        %v1459 = vpop.xlane.xlu0 %1458
        %v1460 = vsel %vm371, %v1424, 0.0
        %1461 = vadd.xlane.f32.xlu0 %v1460
        %v1462 = vpop.xlane.xlu0 %1461
        %v1463 = vsel %vm371, %v1425, 0.0
        %1464 = vadd.xlane.f32.xlu0 %v1463
        %v1465 = vpop.xlane.xlu0 %1464
        %v1466 = vsel %vm371, %v1426, 0.0
        %1467 = vadd.xlane.f32.xlu0 %v1466
        %v1468 = vpop.xlane.xlu0 %1467
        %v1469 = vsel %vm371, %v1427, 0.0
        %1470 = vadd.xlane.f32.xlu0 %v1469
        %v1471 = vpop.xlane.xlu0 %1470
        %v1472 = vsel %vm371, %v1428, 0.0
        %1473 = vadd.xlane.f32.xlu0 %v1472
        %v1474 = vpop.xlane.xlu0 %1473
        %v1475 = vsel %vm371, %v1429, 0.0
        %1476 = vadd.xlane.f32.xlu0 %v1475
        %v1477 = vpop.xlane.xlu0 %1476
        %v1478 = vmul.f32 %v355, %v1432
        %v1479 = vmul.f32 %v356, %v1435
        %v1480 = vmul.f32 %v357, %v1438
        %v1481 = vmul.f32 %v358, %v1441
        %v1482 = vmul.f32 %v359, %v1444
        %v1483 = vmul.f32 %v360, %v1447
        %v1484 = vmul.f32 %v361, %v1450
        %v1485 = vmul.f32 %v362, %v1453
        %v1486 = vmul.f32 %v363, %v1456
        %v1487 = vmul.f32 %v364, %v1459
        %v1488 = vmul.f32 %v365, %v1462
        %v1489 = vmul.f32 %v366, %v1465
        %v1490 = vmul.f32 %v367, %v1468
        %v1491 = vmul.f32 %v368, %v1471
        %v1492 = vmul.f32 %v369, %v1474
        %v1493 = vmul.f32 %v370, %v1477
        %v1494 = vmul.u32 %v263, 16
        %vm1495 = vcmp.ge.s32.totalorder %v266, %v1494
        %v1496 = vadd.s32 %v1494, 16
        %vm1497 = vcmp.lt.s32.totalorder %v266, %v1496
        %vm1498 = vmand %vm1495, %vm1497
        %v1499 = vsel %vm1498, 1, 0
        %v1500 = vcvt.s32.f32 %v1499
        %1501 = vmatprep.subr.mxu0 0.0
        %1502 = vmatpush1.msra.mxu0 %v1493
        %1503 = vmatprep.subr.mxu0 0.0
        %1504 = vmatpush1.msra.mxu0 %v1492
        %1505 = vmatprep.subr.mxu0 0.0
        %1506 = vmatpush1.msra.mxu0 %v1491
        %1507 = vmatprep.subr.mxu0 0.0
        %1508 = vmatpush1.msra.mxu0 %v1490
        %1509 = vmatprep.subr.mxu0 0.0
        %1510 = vmatpush1.msra.mxu0 %v1489
        %1511 = vmatprep.subr.mxu0 0.0
        %1512 = vmatpush1.msra.mxu0 %v1488
        %1513 = vmatprep.subr.mxu0 0.0
        %1514 = vmatpush1.msra.mxu0 %v1487
        %1515 = vmatprep.subr.mxu0 0.0
        %1516 = vmatpush1.msra.mxu0 %v1486
        %1517 = vmatprep.subr.mxu0 0.0
        %1518 = vmatpush1.msra.mxu0 %v1485
        %1519 = vmatprep.subr.mxu0 0.0
        %1520 = vmatpush1.msra.mxu0 %v1484
        %1521 = vmatprep.subr.mxu0 0.0
        %1522 = vmatpush1.msra.mxu0 %v1483
        %1523 = vmatprep.subr.mxu0 0.0
        %1524 = vmatpush1.msra.mxu0 %v1482
        %1525 = vmatprep.subr.mxu0 0.0
        %1526 = vmatpush1.msra.mxu0 %v1481
        %1527 = vmatprep.subr.mxu0 0.0
        %1528 = vmatpush1.msra.mxu0 %v1480
        %1529 = vmatprep.subr.mxu0 0.0
        %1530 = vmatpush1.msra.mxu0 %v1479
        %1531 = vmatprep.subr.mxu0 0.0
        %1532 = vmatpush1.msra.mxu0 %v1478
        %1533 = vmatprep.subr.mxu0 0.0
        %1534 = vmatpush2.msra.mxu0 0.0
        %1535 = vmatprep.subr.mxu0 0.0
        %1536 = vmatpush2.msra.mxu0 0.0
        %1537 = vmatprep.subr.mxu0 0.0
        %1538 = vmatpush2.msra.mxu0 0.0
        %1539 = vmatprep.subr.mxu0 0.0
        %1540 = vmatpush2.msra.mxu0 0.0
        %1541 = vmatprep.subr.mxu0 0.0
        %1542 = vmatpush2.msra.mxu0 0.0
        %1543 = vmatprep.subr.mxu0 0.0
        %1544 = vmatpush2.msra.mxu0 0.0
        %1545 = vmatprep.subr.mxu0 0.0
        %1546 = vmatpush2.msra.mxu0 0.0
        %1547 = vmatprep.subr.mxu0 0.0
        %1548 = vmatpush2.msra.mxu0 0.0
        %1549 = vmatprep.subr.mxu0 0.0
        %1550 = vmatpush2.msra.mxu0 0.0
        %1551 = vmatprep.subr.mxu0 0.0
        %1552 = vmatpush2.msra.mxu0 0.0
        %1553 = vmatprep.subr.mxu0 0.0
        %1554 = vmatpush2.msra.mxu0 0.0
        %1555 = vmatprep.subr.mxu0 0.0
        %1556 = vmatpush2.msra.mxu0 0.0
        %1557 = vmatprep.subr.mxu0 0.0
        %1558 = vmatpush2.msra.mxu0 0.0
        %1559 = vmatprep.subr.mxu0 0.0
        %1560 = vmatpush2.msra.mxu0 0.0
        %1561 = vmatprep.subr.mxu0 0.0
        %1562 = vmatpush2.msra.mxu0 0.0
        %1563 = vmatprep.subr.mxu0 0.0
        %1564 = vmatpush2.msra.mxu0 0.0
        %1565 = vmatprep.mubr.f32.mxu0 0.0
        %1566 = vmatmul.mubr.f32.gmra.mxu0 %v1500
        %v1567 = vpop.f32.mrf.mxu0
        %v1568 = vadd.f32 0.0, %v1567
        %v1569 = vpop.f32.mrf.mxu0
        %1570 = vdwg.mxu0
        %1571 = vst.msk [vmem:[%s245] sm:$0xff] %vm371, %v1568
        %s1572 = sand.u32 %s147, 1
        %s1573 = scalar_lea.sflag [#allocation3], %s1572
        %s1574 = sand.u32 %s147, 1
        %s1575 = smul.addr %s1574, 8
        %s1576 = scalar_lea.vmem [#allocation2], %s1575
        // Predicated region
        $region41: #{tpu_custom_call.1} parent=39 // pred_check
          %p1577 = pneg %p157
        $region42: #{tpu_custom_call.1} parent=39 // pred_check_branch
          %1579 = sbr.rel (%p1577) target = $region44
        $region43: #{tpu_custom_call.1} parent=39 // pred_region
          %s1581 = ssub.s32 128, 128
          %1582 = vsyncadd %s1573, %s1581
          %s1583 = smul.addr %s19, 128
          %s1584 = scalar_lea.hbm %s5, %s1583
          %s1586 = sshll.u32 %s1576, 4
          %s1587 = int_to_ptr.vmem [resolvable:$true] %s1586
          %1589 = dma.vmem_to_hbm [thread:$0]  %s1587, 128, %s1584, %s1573
        $region44: #{tpu_custom_call.1} parent=39 // pred_fallthru
          _
      $region40: #{tpu_custom_call.1} parent=5 // pred_fallthru
        _
      %p1590 = scmp.le.s32.totalorder 2, %s14
      // Predicated region
      $region45: #{tpu_custom_call.1} parent=5 // pred_check
        %p1591 = pneg %p1590
      $region46: #{tpu_custom_call.1} parent=5 // pred_check_branch
        %1593 = sbr.rel (%p1591) target = $region48
      $region47: #{tpu_custom_call.1} parent=5 // pred_region
        %s1594 = ssub.s32 %s14, 2
        // Predicated region
        $region49: #{tpu_custom_call.1} parent=47 // pred_check
          %p1595 = pneg %p163
        $region50: #{tpu_custom_call.1} parent=47 // pred_check_branch
          %1597 = sbr.rel (%p1595) target = $region52
        $region51: #{tpu_custom_call.1} parent=47 // pred_region
          %s1598 = sand.u32 %s148, 1
          %s1599 = scalar_lea.sflag [#allocation3], %s1598
          %s1600 = sand.u32 %s148, 1
          %s1601 = smul.addr %s1600, 8
          %s1602 = scalar_lea.vmem [#allocation2], %s1601
          %1603 = dma.done %s1599, 128
        $region52: #{tpu_custom_call.1} parent=47 // pred_fallthru
          _
      $region48: #{tpu_custom_call.1} parent=5 // pred_fallthru
        _
    $region6: #{tpu_custom_call.1} parent=1 // loop_footer
      %s18 = sadd.s32 1, %s14
    $region7: #{tpu_custom_call.1} parent=1 // loop_footer_branch
      %13 = sbr.rel target = $region3
    $region8: #{tpu_custom_call.1} parent=1 // loop_exit
      _
    %1604 = vsyncpa [#allocation3], 1
    %s1605 = scalar_lea.sflag [#allocation3], 1
    %1606 = vsyncpa %s1605, 1

</llo_original>
